<compile_context>
chip_gen: v5e
topology: v5e:2x2
jax: 0.10.0
libtpu: 0.0.40
codegen_flags: <defaults>
</compile_context>

<pallas_src>
import functools

import jax
import jax.numpy as jnp
from jax import lax
from jax.experimental import pallas as pl
from jax.experimental.pallas import tpu as pltpu


_LANE = 512                  # lane-dense stream width (multiple of 128)
_ROW_QUANTUM = 32            # sublane quantum safe for f32 / bf16 / int8 tiles
_TILE_CAP_BYTES = 8 << 20    # combined (seg+mask) bytes per stream tile
_VMEM_LIMIT = 40 << 20       # explicit scoped-VMEM limit (v5e default is only 16 MiB)


# ----------------------------- in-kernel math helpers -----------------------------

def _softplus(z):
    # numerically stable log(1 + exp(z))
    return jnp.maximum(z, 0.0) + jnp.log1p(jnp.exp(-jnp.abs(z)))


def _row_normalize(x, eps=1e-12):
    return x * lax.rsqrt(jnp.sum(x * x, axis=-1, keepdims=True) + eps)


# ----------------------------- fused loss kernel -----------------------------

def _fused_loss_kernel(seg_ref, msk_ref, v_ref, t_ref, proj_ref,
                       labr_ref, labc_ref, pe_ref, ae_ref, vm_ref, tm_ref,
                       inst_ref, mask_ref, glob_ref, loc_ref,
                       acc_ref, *, num_parts, inv_count, n_rows, tile_rows,
                       ragged, alpha, beta, sp, sn):
    step = pl.program_id(0)
    last = pl.num_programs(0) - 1

    # ------------- embedding losses: computed once, at the first grid step -------------
    @pl.when(step == 0)
    def _():
        acc_ref[...] = jnp.zeros_like(acc_ref)

        v = v_ref[...].astype(jnp.float32)              # (B, D)
        t = t_ref[...].astype(jnp.float32)              # (B, D)
        B = v.shape[0]

        lab_r = labr_ref[...]                           # (1, B) int32
        lab_c = labc_ref[...]                           # (B, 1) int32
        match = (lab_c == lab_r).astype(jnp.float32)    # (B, B), 1.0 where same id

        # ---- instance (softmax CE) loss: one stacked (2B, D) @ (D, C) matmul ----
        w = proj_ref[...].astype(jnp.float32)           # (D, C)
        # F.normalize(projection, p=2, dim=0): normalize each class column
        wn = w * lax.rsqrt(jnp.sum(w * w, axis=0, keepdims=True) + 1e-12)
        x2 = jnp.concatenate([v, t], axis=0)            # (2B, D)
        logits = jnp.dot(x2, wn, preferred_element_type=jnp.float32)   # (2B, C) on MXU
        m = jnp.max(logits, axis=-1, keepdims=True)
        lse = m + jnp.log(jnp.sum(jnp.exp(logits - m), axis=-1, keepdims=True))
        num_classes = logits.shape[-1]
        onehot = (lax.broadcasted_iota(jnp.int32, (B, num_classes), 1)
                  == lab_c).astype(jnp.float32)         # in-kernel one-hot
        lab_sum = jnp.sum((logits[:B, :] + logits[B:, :]) * onehot)
        # ce(v) + ce(t) == (sum(lse over 2B rows) - sum(label logits)) / B
        inst_ref[...] = (jnp.zeros((1, 1), jnp.float32)
                         + (jnp.sum(lse) - lab_sum) / jnp.float32(B))

        # ---- global alignment loss (soft-margin on cosine similarity) ----
        vn = _row_normalize(v)
        tn = _row_normalize(t)
        sim = jnp.dot(vn, tn.T, preferred_element_type=jnp.float32)    # (B, B)
        lp = _softplus(-sp * (sim - alpha)) * match
        ln = _softplus(sn * (sim - beta)) * (1.0 - match)
        glob_ref[...] = (jnp.zeros((1, 1), jnp.float32)
                         + (jnp.sum(lp) + jnp.sum(ln)) / jnp.float32(B))

        # ---- local alignment loss (no-sampling), fori_loop over parts ----
        def part_body(p, acc2):
            pe_p = _row_normalize(pe_ref[p].astype(jnp.float32))       # (B, D)
            ae_p = _row_normalize(ae_ref[p].astype(jnp.float32))       # (B, D)
            simp = jnp.dot(pe_p, ae_p.T, preferred_element_type=jnp.float32)  # (B, B)
            valid = (vm_ref[p].astype(jnp.float32)                     # (B, 1)
                     * tm_ref[p].astype(jnp.float32))                  # (1, B) -> (B, B)
            lpp = _softplus(-sp * (simp - alpha)) * (match * valid)
            lnn = _softplus(sn * (simp - beta)) * ((1.0 - match) * valid)
            return acc2 + (jnp.sum(lpp) + jnp.sum(lnn)) / (jnp.sum(valid) + 1e-6)

        local = lax.fori_loop(0, num_parts, part_body,
                              jnp.zeros((1, 1), jnp.float32))
        loc_ref[...] = local * (1.0 / float(num_parts))

    # ------------- BCE-with-logits mask loss: lane-dense streamed partial sums -------------
    x = seg_ref[...].astype(jnp.float32)
    y = msk_ref[...].astype(jnp.float32)
    bce = jnp.maximum(x, 0.0) - x * y + jnp.log1p(jnp.exp(-jnp.abs(x)))
    if ragged:
        # last grid step may read past the real rows; zero the invalid rows
        grow = lax.broadcasted_iota(jnp.int32, bce.shape, 0) + step * tile_rows
        bce = jnp.where(grow < n_rows, bce, 0.0)
    ld = bce.shape[-1]
    if tile_rows % 8 == 0:
        # pure VALU adds into the (8, ld) vector accumulator (reshape only splits
        # the sublane axis on (8,·) boundaries -> free, no relayout)
        acc_ref[...] = acc_ref[...] + jnp.sum(
            bce.reshape(tile_rows // 8, 8, ld), axis=0)
    else:
        # tiny single-block fallback (tile_rows == n_rows < 32)
        acc_ref[0:1, :] = acc_ref[0:1, :] + jnp.sum(bce, axis=0, keepdims=True)

    @pl.when(step == last)
    def _():
        mask_ref[...] = (jnp.sum(acc_ref[...], keepdims=True)
                         * jnp.float32(inv_count))


# ----------------------------- wrapper -----------------------------

def _pick_tile_rows(rows, row_bytes, cap_bytes=_TILE_CAP_BYTES):
    """Largest multiple of 32 rows whose (seg+mask) tile stays under cap_bytes.
    With cdiv + in-kernel tail masking there is no divisibility requirement."""
    if rows <= _ROW_QUANTUM:
        return rows                       # single full-dim block (always legal)
    t = (cap_bytes // max(row_bytes, 1)) // _ROW_QUANTUM * _ROW_QUANTUM
    t = max(_ROW_QUANTUM, min(t, (rows // _ROW_QUANTUM) * _ROW_QUANTUM))
    return t


def fused_losses(visual_embed, textual_embed, part_embed, attribute_embed,
                 seg_feat, labels, masks, vmask, tmask, projection,
                 alpha=0.6, beta=0.4, scale_pos=10.0, scale_neg=40.0):
    B, D = visual_embed.shape
    _, P, Dp = part_embed.shape
    Bs, Ps, H, W = seg_feat.shape
    assert Bs == B and masks.shape == seg_feat.shape

    # --- lane-dense layout for the only large stream (free row-major reshape) ---
    total = Bs * Ps * H * W
    if total % _LANE == 0:
        rows, ld = total // _LANE, _LANE          # (rows, 512): unmasked vld/vst
    else:
        rows, ld = Bs * Ps, H * W                 # full-width rows (still legal)
    seg2d = seg_feat.reshape(rows, ld)
    msk2d = masks.reshape(rows, ld)               # {0,1} masks: bf16 is exact

    # --- small resident operands: leading part axis for dynamic ref[p] indexing ---
    pe3 = jnp.transpose(part_embed, (1, 0, 2))        # (P, B, D)
    ae3 = jnp.transpose(attribute_embed, (1, 0, 2))   # (P, B, D)
    lab = labels.astype(jnp.int32)
    labr = lab.reshape(1, B)
    labc = lab.reshape(B, 1)
    vm3 = vmask.astype(jnp.float32).T[:, :, None]     # (P, B, 1) visual part validity
    tm3 = tmask.astype(jnp.float32).T[:, None, :]     # (P, 1, B) textual attr validity

    row_bytes = ld * (seg2d.dtype.itemsize + msk2d.dtype.itemsize)
    tile_rows = _pick_tile_rows(rows, row_bytes)
    grid = (pl.cdiv(rows, tile_rows),)
    ragged = (rows % tile_rows) != 0

    kernel = functools.partial(
        _fused_loss_kernel, num_parts=P, inv_count=1.0 / float(total),
        n_rows=rows, tile_rows=tile_rows, ragged=ragged,
        alpha=alpha, beta=beta, sp=scale_pos, sn=scale_neg)

    scalar = jax.ShapeDtypeStruct((1, 1), jnp.float32)
    inst, mask_l, glob, loc = pl.pallas_call(
        kernel,
        out_shape=(scalar, scalar, scalar, scalar),
        grid=grid,
        in_specs=[
            pl.BlockSpec((tile_rows, ld), lambda i: (i, 0)),     # seg logits tile
            pl.BlockSpec((tile_rows, ld), lambda i: (i, 0)),     # mask tile
            pl.BlockSpec((B, D), lambda i: (0, 0)),              # visual embed
            pl.BlockSpec((B, D), lambda i: (0, 0)),              # textual embed
            pl.BlockSpec(projection.shape, lambda i: (0, 0)),    # projection (D, C)
            pl.BlockSpec((1, B), lambda i: (0, 0)),              # labels row
            pl.BlockSpec((B, 1), lambda i: (0, 0)),              # labels col
            pl.BlockSpec((P, B, Dp), lambda i: (0, 0, 0)),       # part embeds
            pl.BlockSpec((P, B, Dp), lambda i: (0, 0, 0)),       # attribute embeds
            pl.BlockSpec((P, B, 1), lambda i: (0, 0, 0)),        # vmask (per part, col)
            pl.BlockSpec((P, 1, B), lambda i: (0, 0, 0)),        # tmask (per part, row)
        ],
        out_specs=[
            pl.BlockSpec((1, 1), lambda i: (0, 0)),              # instance_loss
            pl.BlockSpec((1, 1), lambda i: (0, 0)),              # mask_loss
            pl.BlockSpec((1, 1), lambda i: (0, 0)),              # global_align_loss
            pl.BlockSpec((1, 1), lambda i: (0, 0)),              # local_align_loss
        ],
        scratch_shapes=[pltpu.VMEM((8, ld), jnp.float32)],       # BCE vector accumulator
        compiler_params=pltpu.CompilerParams(
            dimension_semantics=("arbitrary",),
            vmem_limit_bytes=_VMEM_LIMIT),
    )(seg2d, msk2d, visual_embed, textual_embed, projection,
      labr, labc, pe3, ae3, vm3, tm3)

    return {
        "instance_loss": inst[0, 0],
        "mask_loss": mask_l[0, 0],
        "global_align_loss": glob[0, 0],
        "local_align_loss": loc[0, 0],
    }


# ----------------------------- module wrapper -----------------------------

class LossComputation:
    """JAX/Pallas port of MCM-HC segpool_head LossComputation.forward."""

    def __init__(self, feature_size, num_classes, num_parts, k_reciprocal=False, seed=0):
        self.num_parts = num_parts
        self.num_classes = num_classes
        self.k_reciprocal = k_reciprocal
        # Parameter: xavier_uniform_ init of (FEATURE_SIZE, NUM_CLASSES), deterministic
        limit = (6.0 / (feature_size + num_classes)) ** 0.5
        self.projection = jax.random.uniform(
            jax.random.PRNGKey(seed), (feature_size, num_classes),
            minval=-limit, maxval=limit, dtype=jnp.float32)

    def __call__(self, visual_embed, textual_embed, part_embed, attribute_embed,
                 seg_feat, labels, masks, vmask, tmask):
        # (caption field extraction / stacking is host-side glue done by the caller)
        # TODO(synk): k_reciprocal=True uses the sampled local_align_loss (mutual top-k
        # neighbour mining); only the no-sampling variant is implemented, used for both.
        return fused_losses(visual_embed, textual_embed, part_embed, attribute_embed,
                            seg_feat, labels, masks, vmask, tmask, self.projection)


# ----------------------------- demo -----------------------------

if __name__ == "__main__":
    B = 8            # batch
    D = 64           # cfg.MODEL.EMBEDDING.FEATURE_SIZE
    C = 32           # cfg.MODEL.NUM_CLASSES
    P = 4            # cfg.MODEL.NUM_PARTS
    H = W = 16       # seg_feat spatial size

    key = jax.random.PRNGKey(0)
    ks = jax.random.split(key, 8)

    visual_embed = jax.random.normal(ks[0], (B, D), dtype=jnp.float32)
    textual_embed = jax.random.normal(ks[1], (B, D), dtype=jnp.float32)
    part_embed = jax.random.normal(ks[2], (B, P, D), dtype=jnp.float32)
    attribute_embed = jax.random.normal(ks[3], (B, P, D), dtype=jnp.float32)
    seg_feat = jax.random.normal(ks[4], (B, P, H, W), dtype=jnp.float32)   # NCHW logits

    # synthesized caption fields
    labels = jax.random.randint(ks[5], (B,), 0, C, dtype=jnp.int32)        # 'id'
    # masks ('crops') are {0,1}: bf16 is exact and cuts the dominant HBM traffic
    masks = (jax.random.uniform(ks[6], (B, P, H, W)) > 0.5).astype(jnp.bfloat16)
    vmask = (jax.random.uniform(ks[7], (B, P)) > 0.2).astype(jnp.float32)  # 'mask'
    tmask = (jax.random.uniform(jax.random.fold_in(key, 99), (B, P)) > 0.2).astype(jnp.float32)

    module = LossComputation(feature_size=D, num_classes=C, num_parts=P,
                             k_reciprocal=False, seed=0)
    losses = module(visual_embed, textual_embed, part_embed, attribute_embed,
                    seg_feat, labels, masks, vmask, tmask)
    losses = jax.tree_util.tree_map(jax.block_until_ready, losses)

    for k_, v_ in losses.items():
        assert jnp.isfinite(v_), f"non-finite loss {k_}"
    print("KERNEL_OK")
</pallas_src>

<mosaic_0001>
module attributes {stable_mosaic.version = 11 : i64} {
  func.func @_fused_loss_kernel(%arg0: i32, %arg1: memref<16x512xf32, #tpu.memory_space<vmem>>, %arg2: memref<16x512xbf16, #tpu.memory_space<vmem>>, %arg3: memref<8x64xf32, #tpu.memory_space<vmem>>, %arg4: memref<8x64xf32, #tpu.memory_space<vmem>>, %arg5: memref<64x32xf32, #tpu.memory_space<vmem>>, %arg6: memref<1x8xi32, #tpu.memory_space<vmem>>, %arg7: memref<8x1xi32, #tpu.memory_space<vmem>>, %arg8: memref<4x8x64xf32, #tpu.memory_space<vmem>>, %arg9: memref<4x8x64xf32, #tpu.memory_space<vmem>>, %arg10: memref<4x8x1xf32, #tpu.memory_space<vmem>>, %arg11: memref<4x1x8xf32, #tpu.memory_space<vmem>>, %arg12: memref<1x1xf32, #tpu.memory_space<vmem>>, %arg13: memref<1x1xf32, #tpu.memory_space<vmem>>, %arg14: memref<1x1xf32, #tpu.memory_space<vmem>>, %arg15: memref<1x1xf32, #tpu.memory_space<vmem>>, %arg16: memref<8x512xf32, #tpu.memory_space<vmem>>) attributes {dimension_semantics = [#tpu.dimension_semantics<arbitrary>], iteration_bounds = array<i64: 1>, scalar_prefetch = 0 : i64, scratch_operands = 1 : i64, tpu.core_type = #tpu.core_type<tc>, window_params = [{transform_indices = @transform_0, window_bounds = array<i64: 16, 512>}, {transform_indices = @transform_1, window_bounds = array<i64: 16, 512>}, {pipeline_mode = #tpu.pipeline_mode<synchronous>, transform_indices = @transform_2, window_bounds = array<i64: 8, 64>}, {pipeline_mode = #tpu.pipeline_mode<synchronous>, transform_indices = @transform_3, window_bounds = array<i64: 8, 64>}, {pipeline_mode = #tpu.pipeline_mode<synchronous>, transform_indices = @transform_4, window_bounds = array<i64: 64, 32>}, {pipeline_mode = #tpu.pipeline_mode<synchronous>, transform_indices = @transform_5, window_bounds = array<i64: 1, 8>}, {pipeline_mode = #tpu.pipeline_mode<synchronous>, transform_indices = @transform_6, window_bounds = array<i64: 8, 1>}, {pipeline_mode = #tpu.pipeline_mode<synchronous>, transform_indices = @transform_7, window_bounds = array<i64: 4, 8, 64>}, {pipeline_mode = #tpu.pipeline_mode<synchronous>, transform_indices = @transform_8, window_bounds = array<i64: 4, 8, 64>}, {pipeline_mode = #tpu.pipeline_mode<synchronous>, transform_indices = @transform_9, window_bounds = array<i64: 4, 8, 1>}, {pipeline_mode = #tpu.pipeline_mode<synchronous>, transform_indices = @transform_10, window_bounds = array<i64: 4, 1, 8>}, {pipeline_mode = #tpu.pipeline_mode<synchronous>, transform_indices = @transform_11, window_bounds = array<i64: 1, 1>}, {pipeline_mode = #tpu.pipeline_mode<synchronous>, transform_indices = @transform_12, window_bounds = array<i64: 1, 1>}, {pipeline_mode = #tpu.pipeline_mode<synchronous>, transform_indices = @transform_13, window_bounds = array<i64: 1, 1>}, {pipeline_mode = #tpu.pipeline_mode<synchronous>, transform_indices = @transform_14, window_bounds = array<i64: 1, 1>}]} {
    %c0_i32 = arith.constant 0 : i32
    %0 = arith.cmpi eq, %arg0, %c0_i32 : i32
    %1 = arith.extui %0 : i1 to i32
    %c0_i32_0 = arith.constant 0 : i32
    %2 = arith.cmpi ne, %1, %c0_i32_0 : i32
    scf.if %2 {
      %cst_12 = arith.constant 0.000000e+00 : f32
      %24 = vector.broadcast %cst_12 : f32 to vector<8x512xf32>
      %c0_13 = arith.constant 0 : index
      %c0_14 = arith.constant 0 : index
      %25 = vector.load %arg16[%c0_13, %c0_14] : memref<8x512xf32, #tpu.memory_space<vmem>>, vector<8x512xf32>
      tpu.vector_store %arg16[%c0_13, %c0_14], %24 {strides = array<i32>} : memref<8x512xf32, #tpu.memory_space<vmem>>, vector<8x512xf32>,
      %c0_15 = arith.constant 0 : index
      %c0_16 = arith.constant 0 : index
      %26 = vector.load %arg3[%c0_15, %c0_16] : memref<8x64xf32, #tpu.memory_space<vmem>>, vector<8x64xf32>
      %c0_17 = arith.constant 0 : index
      %c0_18 = arith.constant 0 : index
      %27 = vector.load %arg4[%c0_17, %c0_18] : memref<8x64xf32, #tpu.memory_space<vmem>>, vector<8x64xf32>
      %c0_19 = arith.constant 0 : index
      %c0_20 = arith.constant 0 : index
      %28 = vector.load %arg6[%c0_19, %c0_20] : memref<1x8xi32, #tpu.memory_space<vmem>>, vector<1x8xi32>
      %c0_21 = arith.constant 0 : index
      %c0_22 = arith.constant 0 : index
      %29 = vector.load %arg7[%c0_21, %c0_22] : memref<8x1xi32, #tpu.memory_space<vmem>>, vector<8x1xi32>
      %30 = vector.broadcast %29 : vector<8x1xi32> to vector<8x8xi32>
      %31 = vector.broadcast %28 : vector<1x8xi32> to vector<8x8xi32>
      %32 = arith.cmpi eq, %30, %31 : vector<8x8xi32>
      %33 = arith.extui %32 : vector<8x8xi1> to vector<8x8xi32>
      %34 = arith.sitofp %33 : vector<8x8xi32> to vector<8x8xf32>
      %c0_23 = arith.constant 0 : index
      %c0_24 = arith.constant 0 : index
      %35 = vector.load %arg5[%c0_23, %c0_24] : memref<64x32xf32, #tpu.memory_space<vmem>>, vector<64x32xf32>
      %36 = arith.mulf %35, %35 : vector<64x32xf32>
      %cst_25 = arith.constant dense<0.000000e+00> : vector<32xf32>
      %37 = vector.multi_reduction <add>, %36, %cst_25 [0] : vector<64x32xf32> to vector<32xf32>
      %38 = vector.shape_cast %37 : vector<32xf32> to vector<1x32xf32>
      %cst_26 = arith.constant 9.99999996E-13 : f32
      %39 = vector.broadcast %cst_26 : f32 to vector<1x32xf32>
      %40 = arith.addf %38, %39 : vector<1x32xf32>
      %41 = math.rsqrt %40 : vector<1x32xf32>
      %42 = vector.broadcast %41 : vector<1x32xf32> to vector<64x32xf32>
      %43 = arith.mulf %35, %42 : vector<64x32xf32>
      %44 = tpu.concatenate %26, %27 in 0 : vector<8x64xf32>, vector<8x64xf32> -> vector<16x64xf32>
      %cst_27 = arith.constant dense<0.000000e+00> : vector<16x32xf32>
      %45 = tpu.matmul %44, %43, %cst_27 {dimension_numbers = #tpu.dot_dimension_numbers<[1], [0], [0], [1], [0, 0, 1, 1], [], []>} : vector<16x64xf32>, vector<64x32xf32>, vector<16x32xf32> -> vector<16x32xf32>
      %cst_28 = arith.constant dense<0xFF800000> : vector<16xf32>
      %46 = vector.multi_reduction <maximumf>, %45, %cst_28 [1] : vector<16x32xf32> to vector<16xf32>
      %47 = vector.shape_cast %46 : vector<16xf32> to vector<16x1xf32>
      %48 = vector.broadcast %47 : vector<16x1xf32> to vector<16x32xf32>
      %49 = arith.subf %45, %48 : vector<16x32xf32>
      %50 = math.exp %49 : vector<16x32xf32>
      %cst_29 = arith.constant dense<0.000000e+00> : vector<16xf32>
      %51 = vector.multi_reduction <add>, %50, %cst_29 [1] : vector<16x32xf32> to vector<16xf32>
      %52 = vector.shape_cast %51 : vector<16xf32> to vector<16x1xf32>
      %53 = math.log %52 : vector<16x1xf32>
      %54 = arith.addf %47, %53 : vector<16x1xf32>
      %55 = tpu.iota {dimensions = array<i32: 1>} : vector<8x32xi32>
      %56 = vector.broadcast %29 : vector<8x1xi32> to vector<8x32xi32>
      %57 = arith.cmpi eq, %55, %56 : vector<8x32xi32>
      %58 = arith.extui %57 : vector<8x32xi1> to vector<8x32xi32>
      %59 = arith.sitofp %58 : vector<8x32xi32> to vector<8x32xf32>
      %60 = vector.extract_strided_slice %45 {offsets = [0, 0], sizes = [8, 32], strides = [1, 1]} : vector<16x32xf32> to vector<8x32xf32>
      %61 = vector.extract_strided_slice %45 {offsets = [8, 0], sizes = [8, 32], strides = [1, 1]} : vector<16x32xf32> to vector<8x32xf32>
      %62 = arith.addf %60, %61 : vector<8x32xf32>
      %63 = arith.mulf %62, %59 : vector<8x32xf32>
      %64 = vector.shape_cast %63 : vector<8x32xf32> to vector<1x8x32xf32>
      %cst_30 = arith.constant dense<0.000000e+00> : vector<1xf32>
      %65 = vector.multi_reduction <add>, %64, %cst_30 [1, 2] : vector<1x8x32xf32> to vector<1xf32>
      %66 = vector.shape_cast %65 : vector<1xf32> to vector<1x1x1xf32>
      %67 = vector.extract %66[0, 0, 0] : f32 from vector<1x1x1xf32>
      %cst_31 = arith.constant 0.000000e+00 : f32
      %68 = vector.broadcast %cst_31 : f32 to vector<1x1xf32>
      %69 = vector.shape_cast %54 : vector<16x1xf32> to vector<1x16x1xf32>
      %cst_32 = arith.constant dense<0.000000e+00> : vector<1xf32>
      %70 = vector.multi_reduction <add>, %69, %cst_32 [1, 2] : vector<1x16x1xf32> to vector<1xf32>
      %71 = vector.shape_cast %70 : vector<1xf32> to vector<1x1x1xf32>
      %72 = vector.extract %71[0, 0, 0] : f32 from vector<1x1x1xf32>
      %73 = arith.subf %72, %67 : f32
      %cst_33 = arith.constant 8.000000e+00 : f32
      %74 = arith.divf %73, %cst_33 : f32
      %75 = vector.broadcast %74 : f32 to vector<1x1xf32>
      %76 = arith.addf %68, %75 : vector<1x1xf32>
      %c0_34 = arith.constant 0 : index
      %c0_35 = arith.constant 0 : index
      %77 = vector.load %arg12[%c0_34, %c0_35] : memref<1x1xf32, #tpu.memory_space<vmem>>, vector<1x1xf32>
      tpu.vector_store %arg12[%c0_34, %c0_35], %76 {strides = array<i32>} : memref<1x1xf32, #tpu.memory_space<vmem>>, vector<1x1xf32>,
      %78 = arith.mulf %26, %26 : vector<8x64xf32>
      %cst_36 = arith.constant dense<0.000000e+00> : vector<8xf32>
      %79 = vector.multi_reduction <add>, %78, %cst_36 [1] : vector<8x64xf32> to vector<8xf32>
      %80 = vector.shape_cast %79 : vector<8xf32> to vector<8x1xf32>
      %cst_37 = arith.constant 9.99999996E-13 : f32
      %81 = vector.broadcast %cst_37 : f32 to vector<8x1xf32>
      %82 = arith.addf %80, %81 : vector<8x1xf32>
      %83 = math.rsqrt %82 : vector<8x1xf32>
      %84 = vector.broadcast %83 : vector<8x1xf32> to vector<8x64xf32>
      %85 = arith.mulf %26, %84 : vector<8x64xf32>
      %86 = arith.mulf %27, %27 : vector<8x64xf32>
      %cst_38 = arith.constant dense<0.000000e+00> : vector<8xf32>
      %87 = vector.multi_reduction <add>, %86, %cst_38 [1] : vector<8x64xf32> to vector<8xf32>
      %88 = vector.shape_cast %87 : vector<8xf32> to vector<8x1xf32>
      %cst_39 = arith.constant 9.99999996E-13 : f32
      %89 = vector.broadcast %cst_39 : f32 to vector<8x1xf32>
      %90 = arith.addf %88, %89 : vector<8x1xf32>
      %91 = math.rsqrt %90 : vector<8x1xf32>
      %92 = vector.broadcast %91 : vector<8x1xf32> to vector<8x64xf32>
      %93 = arith.mulf %27, %92 : vector<8x64xf32>
      %94 = tpu.transpose %93, [1, 0] : vector<8x64xf32> -> vector<64x8xf32>
      %cst_40 = arith.constant dense<0.000000e+00> : vector<8x8xf32>
      %95 = tpu.matmul %85, %94, %cst_40 {dimension_numbers = #tpu.dot_dimension_numbers<[1], [0], [0], [1], [0, 0, 1, 1], [], []>} : vector<8x64xf32>, vector<64x8xf32>, vector<8x8xf32> -> vector<8x8xf32>
      %cst_41 = arith.constant 6.000000e-01 : f32
      %96 = vector.broadcast %cst_41 : f32 to vector<8x8xf32>
      %97 = arith.subf %95, %96 : vector<8x8xf32>
      %cst_42 = arith.constant -1.000000e+01 : f32
      %98 = vector.broadcast %cst_42 : f32 to vector<8x8xf32>
      %99 = arith.mulf %98, %97 : vector<8x8xf32>
      %cst_43 = arith.constant 0.000000e+00 : f32
      %100 = vector.broadcast %cst_43 : f32 to vector<8x8xf32>
      %101 = arith.maximumf %99, %100 : vector<8x8xf32>
      %102 = math.absf %99 : vector<8x8xf32>
      %cst_44 = arith.constant 0.000000e+00 : f32
      %103 = vector.broadcast %cst_44 : f32 to vector<8x8xf32>
      %104 = arith.subf %103, %102 : vector<8x8xf32>
      %105 = math.exp %104 : vector<8x8xf32>
      %106 = math.log1p %105 : vector<8x8xf32>
      %107 = arith.addf %101, %106 : vector<8x8xf32>
      %108 = arith.mulf %107, %34 : vector<8x8xf32>
      %cst_45 = arith.constant 4.000000e-01 : f32
      %109 = vector.broadcast %cst_45 : f32 to vector<8x8xf32>
      %110 = arith.subf %95, %109 : vector<8x8xf32>
      %cst_46 = arith.constant 4.000000e+01 : f32
      %111 = vector.broadcast %cst_46 : f32 to vector<8x8xf32>
      %112 = arith.mulf %111, %110 : vector<8x8xf32>
      %cst_47 = arith.constant 0.000000e+00 : f32
      %113 = vector.broadcast %cst_47 : f32 to vector<8x8xf32>
      %114 = arith.maximumf %112, %113 : vector<8x8xf32>
      %115 = math.absf %112 : vector<8x8xf32>
      %cst_48 = arith.constant 0.000000e+00 : f32
      %116 = vector.broadcast %cst_48 : f32 to vector<8x8xf32>
      %117 = arith.subf %116, %115 : vector<8x8xf32>
      %118 = math.exp %117 : vector<8x8xf32>
      %119 = math.log1p %118 : vector<8x8xf32>
      %120 = arith.addf %114, %119 : vector<8x8xf32>
      %cst_49 = arith.constant 1.000000e+00 : f32
      %121 = vector.broadcast %cst_49 : f32 to vector<8x8xf32>
      %122 = arith.subf %121, %34 : vector<8x8xf32>
      %123 = arith.mulf %120, %122 : vector<8x8xf32>
      %cst_50 = arith.constant 0.000000e+00 : f32
      %124 = vector.broadcast %cst_50 : f32 to vector<1x1xf32>
      %125 = vector.shape_cast %108 : vector<8x8xf32> to vector<1x8x8xf32>
      %cst_51 = arith.constant dense<0.000000e+00> : vector<1xf32>
      %126 = vector.multi_reduction <add>, %125, %cst_51 [1, 2] : vector<1x8x8xf32> to vector<1xf32>
      %127 = vector.shape_cast %126 : vector<1xf32> to vector<1x1x1xf32>
      %128 = vector.extract %127[0, 0, 0] : f32 from vector<1x1x1xf32>
      %129 = vector.shape_cast %123 : vector<8x8xf32> to vector<1x8x8xf32>
      %cst_52 = arith.constant dense<0.000000e+00> : vector<1xf32>
      %130 = vector.multi_reduction <add>, %129, %cst_52 [1, 2] : vector<1x8x8xf32> to vector<1xf32>
      %131 = vector.shape_cast %130 : vector<1xf32> to vector<1x1x1xf32>
      %132 = vector.extract %131[0, 0, 0] : f32 from vector<1x1x1xf32>
      %133 = arith.addf %128, %132 : f32
      %cst_53 = arith.constant 8.000000e+00 : f32
      %134 = arith.divf %133, %cst_53 : f32
      %135 = vector.broadcast %134 : f32 to vector<1x1xf32>
      %136 = arith.addf %124, %135 : vector<1x1xf32>
      %c0_54 = arith.constant 0 : index
      %c0_55 = arith.constant 0 : index
      %137 = vector.load %arg14[%c0_54, %c0_55] : memref<1x1xf32, #tpu.memory_space<vmem>>, vector<1x1xf32>
      tpu.vector_store %arg14[%c0_54, %c0_55], %136 {strides = array<i32>} : memref<1x1xf32, #tpu.memory_space<vmem>>, vector<1x1xf32>,
      %cst_56 = arith.constant 0.000000e+00 : f32
      %138 = vector.broadcast %cst_56 : f32 to vector<1x1xf32>
      %c0_i32_57 = arith.constant 0 : i32
      %c4_i32 = arith.constant 4 : i32
      %139 = arith.addi %c0_i32_57, %c4_i32 : i32
      %c1_i32 = arith.constant 1 : i32
      %140 = scf.for %arg17 = %c0_i32_57 to %139 step %c1_i32 iter_args(%arg18 = %138) -> (vector<1x1xf32>)  : i32 {
        %144 = arith.index_cast %arg17 : i32 to index
        %c0_62 = arith.constant 0 : index
        %c0_63 = arith.constant 0 : index
        %145 = vector.load %arg8[%144, %c0_62, %c0_63] : memref<4x8x64xf32, #tpu.memory_space<vmem>>, vector<1x8x64xf32>
        %146 = vector.shape_cast %145 : vector<1x8x64xf32> to vector<8x64xf32>
        %147 = arith.mulf %146, %146 : vector<8x64xf32>
        %cst_64 = arith.constant dense<0.000000e+00> : vector<8xf32>
        %148 = vector.multi_reduction <add>, %147, %cst_64 [1] : vector<8x64xf32> to vector<8xf32>
        %149 = vector.shape_cast %148 : vector<8xf32> to vector<8x1xf32>
        %cst_65 = arith.constant 9.99999996E-13 : f32
        %150 = vector.broadcast %cst_65 : f32 to vector<8x1xf32>
        %151 = arith.addf %149, %150 : vector<8x1xf32>
        %152 = math.rsqrt %151 : vector<8x1xf32>
        %153 = vector.broadcast %152 : vector<8x1xf32> to vector<8x64xf32>
        %154 = arith.mulf %146, %153 : vector<8x64xf32>
        %155 = arith.index_cast %arg17 : i32 to index
        %c0_66 = arith.constant 0 : index
        %c0_67 = arith.constant 0 : index
        %156 = vector.load %arg9[%155, %c0_66, %c0_67] : memref<4x8x64xf32, #tpu.memory_space<vmem>>, vector<1x8x64xf32>
        %157 = vector.shape_cast %156 : vector<1x8x64xf32> to vector<8x64xf32>
        %158 = arith.mulf %157, %157 : vector<8x64xf32>
        %cst_68 = arith.constant dense<0.000000e+00> : vector<8xf32>
        %159 = vector.multi_reduction <add>, %158, %cst_68 [1] : vector<8x64xf32> to vector<8xf32>
        %160 = vector.shape_cast %159 : vector<8xf32> to vector<8x1xf32>
        %cst_69 = arith.constant 9.99999996E-13 : f32
        %161 = vector.broadcast %cst_69 : f32 to vector<8x1xf32>
        %162 = arith.addf %160, %161 : vector<8x1xf32>
        %163 = math.rsqrt %162 : vector<8x1xf32>
        %164 = vector.broadcast %163 : vector<8x1xf32> to vector<8x64xf32>
        %165 = arith.mulf %157, %164 : vector<8x64xf32>
        %166 = tpu.transpose %165, [1, 0] : vector<8x64xf32> -> vector<64x8xf32>
        %cst_70 = arith.constant dense<0.000000e+00> : vector<8x8xf32>
        %167 = tpu.matmul %154, %166, %cst_70 {dimension_numbers = #tpu.dot_dimension_numbers<[1], [0], [0], [1], [0, 0, 1, 1], [], []>} : vector<8x64xf32>, vector<64x8xf32>, vector<8x8xf32> -> vector<8x8xf32>
        %168 = arith.index_cast %arg17 : i32 to index
        %c0_71 = arith.constant 0 : index
        %c0_72 = arith.constant 0 : index
        %169 = vector.load %arg10[%168, %c0_71, %c0_72] : memref<4x8x1xf32, #tpu.memory_space<vmem>>, vector<1x8x1xf32>
        %170 = vector.shape_cast %169 : vector<1x8x1xf32> to vector<8x1xf32>
        %171 = arith.index_cast %arg17 : i32 to index
        %c0_73 = arith.constant 0 : index
        %c0_74 = arith.constant 0 : index
        %172 = vector.load %arg11[%171, %c0_73, %c0_74] : memref<4x1x8xf32, #tpu.memory_space<vmem>>, vector<1x1x8xf32>
        %173 = vector.shape_cast %172 : vector<1x1x8xf32> to vector<1x8xf32>
        %174 = vector.broadcast %170 : vector<8x1xf32> to vector<8x8xf32>
        %175 = vector.broadcast %173 : vector<1x8xf32> to vector<8x8xf32>
        %176 = arith.mulf %174, %175 : vector<8x8xf32>
        %cst_75 = arith.constant 6.000000e-01 : f32
        %177 = vector.broadcast %cst_75 : f32 to vector<8x8xf32>
        %178 = arith.subf %167, %177 : vector<8x8xf32>
        %cst_76 = arith.constant -1.000000e+01 : f32
        %179 = vector.broadcast %cst_76 : f32 to vector<8x8xf32>
        %180 = arith.mulf %179, %178 : vector<8x8xf32>
        %cst_77 = arith.constant 0.000000e+00 : f32
        %181 = vector.broadcast %cst_77 : f32 to vector<8x8xf32>
        %182 = arith.maximumf %180, %181 : vector<8x8xf32>
        %183 = math.absf %180 : vector<8x8xf32>
        %cst_78 = arith.constant 0.000000e+00 : f32
        %184 = vector.broadcast %cst_78 : f32 to vector<8x8xf32>
        %185 = arith.subf %184, %183 : vector<8x8xf32>
        %186 = math.exp %185 : vector<8x8xf32>
        %187 = math.log1p %186 : vector<8x8xf32>
        %188 = arith.addf %182, %187 : vector<8x8xf32>
        %189 = arith.mulf %34, %176 : vector<8x8xf32>
        %190 = arith.mulf %188, %189 : vector<8x8xf32>
        %cst_79 = arith.constant 4.000000e-01 : f32
        %191 = vector.broadcast %cst_79 : f32 to vector<8x8xf32>
        %192 = arith.subf %167, %191 : vector<8x8xf32>
        %cst_80 = arith.constant 4.000000e+01 : f32
        %193 = vector.broadcast %cst_80 : f32 to vector<8x8xf32>
        %194 = arith.mulf %193, %192 : vector<8x8xf32>
        %cst_81 = arith.constant 0.000000e+00 : f32
        %195 = vector.broadcast %cst_81 : f32 to vector<8x8xf32>
        %196 = arith.maximumf %194, %195 : vector<8x8xf32>
        %197 = math.absf %194 : vector<8x8xf32>
        %cst_82 = arith.constant 0.000000e+00 : f32
        %198 = vector.broadcast %cst_82 : f32 to vector<8x8xf32>
        %199 = arith.subf %198, %197 : vector<8x8xf32>
        %200 = math.exp %199 : vector<8x8xf32>
        %201 = math.log1p %200 : vector<8x8xf32>
        %202 = arith.addf %196, %201 : vector<8x8xf32>
        %cst_83 = arith.constant 1.000000e+00 : f32
        %203 = vector.broadcast %cst_83 : f32 to vector<8x8xf32>
        %204 = arith.subf %203, %34 : vector<8x8xf32>
        %205 = arith.mulf %204, %176 : vector<8x8xf32>
        %206 = arith.mulf %202, %205 : vector<8x8xf32>
        %207 = vector.shape_cast %190 : vector<8x8xf32> to vector<1x8x8xf32>
        %cst_84 = arith.constant dense<0.000000e+00> : vector<1xf32>
        %208 = vector.multi_reduction <add>, %207, %cst_84 [1, 2] : vector<1x8x8xf32> to vector<1xf32>
        %209 = vector.shape_cast %208 : vector<1xf32> to vector<1x1x1xf32>
        %210 = vector.extract %209[0, 0, 0] : f32 from vector<1x1x1xf32>
        %211 = vector.shape_cast %206 : vector<8x8xf32> to vector<1x8x8xf32>
        %cst_85 = arith.constant dense<0.000000e+00> : vector<1xf32>
        %212 = vector.multi_reduction <add>, %211, %cst_85 [1, 2] : vector<1x8x8xf32> to vector<1xf32>
        %213 = vector.shape_cast %212 : vector<1xf32> to vector<1x1x1xf32>
        %214 = vector.extract %213[0, 0, 0] : f32 from vector<1x1x1xf32>
        %215 = arith.addf %210, %214 : f32
        %216 = vector.shape_cast %176 : vector<8x8xf32> to vector<1x8x8xf32>
        %cst_86 = arith.constant dense<0.000000e+00> : vector<1xf32>
        %217 = vector.multi_reduction <add>, %216, %cst_86 [1, 2] : vector<1x8x8xf32> to vector<1xf32>
        %218 = vector.shape_cast %217 : vector<1xf32> to vector<1x1x1xf32>
        %219 = vector.extract %218[0, 0, 0] : f32 from vector<1x1x1xf32>
        %cst_87 = arith.constant 9.99999997E-7 : f32
        %220 = arith.addf %219, %cst_87 : f32
        %221 = arith.divf %215, %220 : f32
        %222 = vector.broadcast %221 : f32 to vector<1x1xf32>
        %223 = arith.addf %arg18, %222 : vector<1x1xf32>
        scf.yield %223 : vector<1x1xf32>
      }
      %c4_i32_58 = arith.constant 4 : i32
      %cst_59 = arith.constant 2.500000e-01 : f32
      %141 = vector.broadcast %cst_59 : f32 to vector<1x1xf32>
      %142 = arith.mulf %140, %141 : vector<1x1xf32>
      %c0_60 = arith.constant 0 : index
      %c0_61 = arith.constant 0 : index
      %143 = vector.load %arg15[%c0_60, %c0_61] : memref<1x1xf32, #tpu.memory_space<vmem>>, vector<1x1xf32>
      tpu.vector_store %arg15[%c0_60, %c0_61], %142 {strides = array<i32>} : memref<1x1xf32, #tpu.memory_space<vmem>>, vector<1x1xf32>,
    } else {
    }
    %c0 = arith.constant 0 : index
    %c0_1 = arith.constant 0 : index
    %3 = vector.load %arg1[%c0, %c0_1] : memref<16x512xf32, #tpu.memory_space<vmem>>, vector<16x512xf32>
    %c0_2 = arith.constant 0 : index
    %c0_3 = arith.constant 0 : index
    %4 = vector.load %arg2[%c0_2, %c0_3] : memref<16x512xbf16, #tpu.memory_space<vmem>>, vector<16x512xbf16>
    %5 = arith.extf %4 : vector<16x512xbf16> to vector<16x512xf32>
    %cst = arith.constant 0.000000e+00 : f32
    %6 = vector.broadcast %cst : f32 to vector<16x512xf32>
    %7 = arith.maximumf %3, %6 : vector<16x512xf32>
    %8 = arith.mulf %3, %5 : vector<16x512xf32>
    %9 = arith.subf %7, %8 : vector<16x512xf32>
    %10 = math.absf %3 : vector<16x512xf32>
    %cst_4 = arith.constant 0.000000e+00 : f32
    %11 = vector.broadcast %cst_4 : f32 to vector<16x512xf32>
    %12 = arith.subf %11, %10 : vector<16x512xf32>
    %13 = math.exp %12 : vector<16x512xf32>
    %14 = math.log1p %13 : vector<16x512xf32>
    %15 = arith.addf %9, %14 : vector<16x512xf32>
    %c0_5 = arith.constant 0 : index
    %c0_6 = arith.constant 0 : index
    %16 = vector.load %arg16[%c0_5, %c0_6] : memref<8x512xf32, #tpu.memory_space<vmem>>, vector<8x512xf32>
    %17 = vector.shape_cast %15 : vector<16x512xf32> to vector<2x8x512xf32>
    %cst_7 = arith.constant dense<0.000000e+00> : vector<8x512xf32>
    %18 = vector.multi_reduction <add>, %17, %cst_7 [0] : vector<2x8x512xf32> to vector<8x512xf32>
    %19 = arith.addf %16, %18 : vector<8x512xf32>
    %c0_8 = arith.constant 0 : index
    %c0_9 = arith.constant 0 : index
    %20 = vector.load %arg16[%c0_8, %c0_9] : memref<8x512xf32, #tpu.memory_space<vmem>>, vector<8x512xf32>
    tpu.vector_store %arg16[%c0_8, %c0_9], %19 {strides = array<i32>} : memref<8x512xf32, #tpu.memory_space<vmem>>, vector<8x512xf32>,
    %c0_i32_10 = arith.constant 0 : i32
    %21 = arith.cmpi eq, %arg0, %c0_i32_10 : i32
    %22 = arith.extui %21 : i1 to i32
    %c0_i32_11 = arith.constant 0 : i32
    %23 = arith.cmpi ne, %22, %c0_i32_11 : i32
    scf.if %23 {
      %c0_12 = arith.constant 0 : index
      %c0_13 = arith.constant 0 : index
      %24 = vector.load %arg16[%c0_12, %c0_13] : memref<8x512xf32, #tpu.memory_space<vmem>>, vector<8x512xf32>
      %25 = vector.shape_cast %24 : vector<8x512xf32> to vector<1x8x512xf32>
      %cst_14 = arith.constant dense<0.000000e+00> : vector<1xf32>
      %26 = vector.multi_reduction <add>, %25, %cst_14 [1, 2] : vector<1x8x512xf32> to vector<1xf32>
      %27 = vector.shape_cast %26 : vector<1xf32> to vector<1x1x1xf32>
      %28 = vector.extract %27[0, 0, 0] : f32 from vector<1x1x1xf32>
      %29 = vector.broadcast %28 : f32 to vector<1x1xf32>
      %cst_15 = arith.constant 1.22070313E-4 : f32
      %30 = vector.broadcast %cst_15 : f32 to vector<1x1xf32>
      %31 = arith.mulf %29, %30 : vector<1x1xf32>
      %c0_16 = arith.constant 0 : index
      %c0_17 = arith.constant 0 : index
      %32 = vector.load %arg13[%c0_16, %c0_17] : memref<1x1xf32, #tpu.memory_space<vmem>>, vector<1x1xf32>
      tpu.vector_store %arg13[%c0_16, %c0_17], %31 {strides = array<i32>} : memref<1x1xf32, #tpu.memory_space<vmem>>, vector<1x1xf32>,
    } else {
    }
    return
  }
  func.func @transform_0(%arg0: i32) -> (i32, i32) {
    %c0_i32 = arith.constant 0 : i32
    %c0_i32_0 = arith.constant 0 : i32
    return %arg0, %c0_i32 : i32, i32
  }
  func.func @transform_1(%arg0: i32) -> (i32, i32) {
    %c0_i32 = arith.constant 0 : i32
    %c0_i32_0 = arith.constant 0 : i32
    return %arg0, %c0_i32 : i32, i32
  }
  func.func @transform_2(%arg0: i32) -> (i32, i32) {
    %c0_i32 = arith.constant 0 : i32
    %c0_i32_0 = arith.constant 0 : i32
    %c0_i32_1 = arith.constant 0 : i32
    return %c0_i32, %c0_i32_0 : i32, i32
  }
  func.func @transform_3(%arg0: i32) -> (i32, i32) {
    %c0_i32 = arith.constant 0 : i32
    %c0_i32_0 = arith.constant 0 : i32
    %c0_i32_1 = arith.constant 0 : i32
    return %c0_i32, %c0_i32_0 : i32, i32
  }
  func.func @transform_4(%arg0: i32) -> (i32, i32) {
    %c0_i32 = arith.constant 0 : i32
    %c0_i32_0 = arith.constant 0 : i32
    %c0_i32_1 = arith.constant 0 : i32
    return %c0_i32, %c0_i32_0 : i32, i32
  }
  func.func @transform_5(%arg0: i32) -> (i32, i32) {
    %c0_i32 = arith.constant 0 : i32
    %c0_i32_0 = arith.constant 0 : i32
    %c0_i32_1 = arith.constant 0 : i32
    return %c0_i32, %c0_i32_0 : i32, i32
  }
  func.func @transform_6(%arg0: i32) -> (i32, i32) {
    %c0_i32 = arith.constant 0 : i32
    %c0_i32_0 = arith.constant 0 : i32
    %c0_i32_1 = arith.constant 0 : i32
    return %c0_i32, %c0_i32_0 : i32, i32
  }
  func.func @transform_7(%arg0: i32) -> (i32, i32, i32) {
    %c0_i32 = arith.constant 0 : i32
    %c0_i32_0 = arith.constant 0 : i32
    %c0_i32_1 = arith.constant 0 : i32
    %c0_i32_2 = arith.constant 0 : i32
    return %c0_i32, %c0_i32_0, %c0_i32_1 : i32, i32, i32
  }
  func.func @transform_8(%arg0: i32) -> (i32, i32, i32) {
    %c0_i32 = arith.constant 0 : i32
    %c0_i32_0 = arith.constant 0 : i32
    %c0_i32_1 = arith.constant 0 : i32
    %c0_i32_2 = arith.constant 0 : i32
    return %c0_i32, %c0_i32_0, %c0_i32_1 : i32, i32, i32
  }
  func.func @transform_9(%arg0: i32) -> (i32, i32, i32) {
    %c0_i32 = arith.constant 0 : i32
    %c0_i32_0 = arith.constant 0 : i32
    %c0_i32_1 = arith.constant 0 : i32
    %c0_i32_2 = arith.constant 0 : i32
    return %c0_i32, %c0_i32_0, %c0_i32_1 : i32, i32, i32
  }
  func.func @transform_10(%arg0: i32) -> (i32, i32, i32) {
    %c0_i32 = arith.constant 0 : i32
    %c0_i32_0 = arith.constant 0 : i32
    %c0_i32_1 = arith.constant 0 : i32
    %c0_i32_2 = arith.constant 0 : i32
    return %c0_i32, %c0_i32_0, %c0_i32_1 : i32, i32, i32
  }
  func.func @transform_11(%arg0: i32) -> (i32, i32) {
    %c0_i32 = arith.constant 0 : i32
    %c0_i32_0 = arith.constant 0 : i32
    %c0_i32_1 = arith.constant 0 : i32
    return %c0_i32, %c0_i32_0 : i32, i32
  }
  func.func @transform_12(%arg0: i32) -> (i32, i32) {
    %c0_i32 = arith.constant 0 : i32
    %c0_i32_0 = arith.constant 0 : i32
    %c0_i32_1 = arith.constant 0 : i32
    return %c0_i32, %c0_i32_0 : i32, i32
  }
  func.func @transform_13(%arg0: i32) -> (i32, i32) {
    %c0_i32 = arith.constant 0 : i32
    %c0_i32_0 = arith.constant 0 : i32
    %c0_i32_1 = arith.constant 0 : i32
    return %c0_i32, %c0_i32_0 : i32, i32
  }
  func.func @transform_14(%arg0: i32) -> (i32, i32) {
    %c0_i32 = arith.constant 0 : i32
    %c0_i32_0 = arith.constant 0 : i32
    %c0_i32_1 = arith.constant 0 : i32
    return %c0_i32, %c0_i32_0 : i32, i32
  }
}

</mosaic_0001>

<llo_original>
// kernel: tpu_custom_call.1
$region0: #{tpu_custom_call.1}
  #allocation0 [shape = 'u32[]', space=smem, size = 0x4, offset = 0x4, fixed_abs, tag = 'smem constant byte address 0x4 - core index']
  #allocation1 [shape = 'u32[72,128]{1,0:T(1,128)}', space=vmem, size = 0x9000, scoped, tag = 'internal scratch']
  #allocation2 [shape = 'f32[8,512]{1,0:T(8,128)}', space=vmem, size = 0x4000, scoped, tag = 'scratch operand']
  %s0 = inlined_call_operand.vmem [shape: f32[16,512], index: 0, kind: input, shape index: {}]
  %s1 = inlined_call_operand.vmem [shape: bf16[16,512], index: 1, kind: input, shape index: {}]
  %s2 = inlined_call_operand.vmem [shape: f32[8,64], index: 2, kind: input, shape index: {}]
  %s3 = inlined_call_operand.hbm [shape: f32[8,64], index: 3, kind: input, shape index: {}]
  %s4 = inlined_call_operand.vmem [shape: f32[64,32], index: 4, kind: input, shape index: {}]
  %s5 = inlined_call_operand.vmem [shape: s32[1,8], index: 5, kind: input, shape index: {}]
  %s6 = inlined_call_operand.vmem [shape: s32[8,1], index: 6, kind: input, shape index: {}]
  %s7 = inlined_call_operand.hbm [shape: f32[4,8,64], index: 7, kind: input, shape index: {}]
  %s8 = inlined_call_operand.hbm [shape: f32[4,8,64], index: 8, kind: input, shape index: {}]
  %s9 = inlined_call_operand.vmem [shape: f32[4,8,1], index: 9, kind: input, shape index: {}]
  %s10 = inlined_call_operand.vmem [shape: f32[4,1,8], index: 10, kind: input, shape index: {}]
  %s11 = inlined_call_operand.hbm [shape: f32[1,1], index: 11, kind: output, shape index: {0}]
  %s12 = inlined_call_operand.hbm [shape: f32[1,1], index: 12, kind: output, shape index: {1}]
  %s13 = inlined_call_operand.hbm [shape: f32[1,1], index: 13, kind: output, shape index: {2}]
  %s14 = inlined_call_operand.hbm [shape: f32[1,1], index: 14, kind: output, shape index: {3}]
  %15 = xla_tuple %s11, %s12, %s13, %s14
  %s16 = sld [smem:[#allocation0]]
  $region105: #{tpu_custom_call.1} parent=0
    _
  %s18 = ssub.s32 1, %s16
  %s19 = scalar_select 0, %s18, %s16
  $region1: #{tpu_custom_call.1} parent=0
    #allocation3 [shape = 'u8[4096]{0}', space=vmem, size = 0x1000, scoped, tag = 'input window, operand 3, single buffered']
    #allocation4 [shape = 's32[1]{0}', space=sflag, size = 0x4, scoped, tag = 'scoped memory for tpu_custom_call.1']
    #allocation5 [shape = 's32[1]{0}', space=sflag, size = 0x4, scoped, tag = 'scoped memory for tpu_custom_call.1']
    #allocation6 [shape = 'u8[16384]{0}', space=vmem, size = 0x4000, scoped, tag = 'input window, operand 7, single buffered']
    #allocation7 [shape = 's32[1]{0}', space=sflag, size = 0x4, scoped, tag = 'scoped memory for tpu_custom_call.1']
    #allocation8 [shape = 'u8[16384]{0}', space=vmem, size = 0x4000, scoped, tag = 'input window, operand 8, single buffered']
    #allocation9 [shape = 'u8[512]{0}', space=vmem, size = 0x400, scoped, tag = 'output window, operand 0, single buffered']
    #allocation10 [shape = 'u8[512]{0}', space=vmem, size = 0x400, scoped, tag = 'output window, operand 1, single buffered']
    #allocation11 [shape = 's32[1]{0}', space=sflag, size = 0x4, scoped, tag = 'scoped memory for tpu_custom_call.1']
    #allocation12 [shape = 'u8[512]{0}', space=vmem, size = 0x400, scoped, tag = 'output window, operand 2, single buffered']
    #allocation13 [shape = 'u8[512]{0}', space=vmem, size = 0x400, scoped, tag = 'output window, operand 3, single buffered']
    #allocation14 [shape = 's32[1]{0}', space=sflag, size = 0x4, scoped, tag = 'scoped memory for tpu_custom_call.1']
    %20 = vsyncpa [#allocation4], 0
    %21 = vsyncpa [#allocation7], 0
    %22 = vsyncpa [#allocation5], 0
    %23 = vsyncpa [#allocation11], 0
    %24 = vsyncpa [#allocation14], 0
    // Predicated region
    $region2: #{tpu_custom_call.1} parent=1 // pred_check
      _
    $region3: #{tpu_custom_call.1} parent=1 // pred_check_branch
      %26 = sbr.rel (0) target = $region5
    $region4: #{tpu_custom_call.1} parent=1 // pred_region
      _
    $region5: #{tpu_custom_call.1} parent=1 // pred_fallthru
      _
    // Predicated region
    $region6: #{tpu_custom_call.1} parent=1 // pred_check
      _
    $region7: #{tpu_custom_call.1} parent=1 // pred_check_branch
      %28 = sbr.rel (0) target = $region9
    $region8: #{tpu_custom_call.1} parent=1 // pred_region
      _
    $region9: #{tpu_custom_call.1} parent=1 // pred_fallthru
      _
    // Predicated region
    $region10: #{tpu_custom_call.1} parent=1 // pred_check
      _
    $region11: #{tpu_custom_call.1} parent=1 // pred_check_branch
      %30 = sbr.rel (0) target = $region13
    $region12: #{tpu_custom_call.1} parent=1 // pred_region
      _
    $region13: #{tpu_custom_call.1} parent=1 // pred_fallthru
      _
    // Predicated region
    $region14: #{tpu_custom_call.1} parent=1 // pred_check
      _
    $region15: #{tpu_custom_call.1} parent=1 // pred_check_branch
      %32 = sbr.rel (0) target = $region17
    $region16: #{tpu_custom_call.1} parent=1 // pred_region
      %34 = vsyncadd [#allocation4], 0
      %s36 = sshll.u32 %s3, 4
      %s37 = int_to_ptr.hbm [resolvable:$true] %s36
      %s38 = sshll.u32 [#allocation3], 4
      %s39 = int_to_ptr.vmem [resolvable:$true] %s38
      %41 = dma.hbm_to_vmem [thread:$0]  %s37, 128, %s39, [#allocation4]
    $region17: #{tpu_custom_call.1} parent=1 // pred_fallthru
      _
    // Predicated region
    $region18: #{tpu_custom_call.1} parent=1 // pred_check
      _
    $region19: #{tpu_custom_call.1} parent=1 // pred_check_branch
      %43 = sbr.rel (0) target = $region21
    $region20: #{tpu_custom_call.1} parent=1 // pred_region
      _
    $region21: #{tpu_custom_call.1} parent=1 // pred_fallthru
      _
    // Predicated region
    $region22: #{tpu_custom_call.1} parent=1 // pred_check
      _
    $region23: #{tpu_custom_call.1} parent=1 // pred_check_branch
      %45 = sbr.rel (0) target = $region25
    $region24: #{tpu_custom_call.1} parent=1 // pred_region
      _
    $region25: #{tpu_custom_call.1} parent=1 // pred_fallthru
      _
    // Predicated region
    $region26: #{tpu_custom_call.1} parent=1 // pred_check
      _
    $region27: #{tpu_custom_call.1} parent=1 // pred_check_branch
      %47 = sbr.rel (0) target = $region29
    $region28: #{tpu_custom_call.1} parent=1 // pred_region
      _
    $region29: #{tpu_custom_call.1} parent=1 // pred_fallthru
      _
    // Predicated region
    $region30: #{tpu_custom_call.1} parent=1 // pred_check
      _
    $region31: #{tpu_custom_call.1} parent=1 // pred_check_branch
      %49 = sbr.rel (0) target = $region33
    $region32: #{tpu_custom_call.1} parent=1 // pred_region
      %51 = vsyncadd [#allocation7], 0
      %s52 = sshll.u32 %s7, 4
      %s53 = int_to_ptr.hbm [resolvable:$true] %s52
      %s54 = sshll.u32 [#allocation6], 4
      %s55 = int_to_ptr.vmem [resolvable:$true] %s54
      %60 = dma.hbm_to_vmem [thread:$0]  %s53, 512, %s55, [#allocation7], 128, 128, 8
    $region33: #{tpu_custom_call.1} parent=1 // pred_fallthru
      _
    // Predicated region
    $region34: #{tpu_custom_call.1} parent=1 // pred_check
      _
    $region35: #{tpu_custom_call.1} parent=1 // pred_check_branch
      %62 = sbr.rel (0) target = $region37
    $region36: #{tpu_custom_call.1} parent=1 // pred_region
      %64 = vsyncadd [#allocation7], 0
      %s65 = sshll.u32 %s8, 4
      %s66 = int_to_ptr.hbm [resolvable:$true] %s65
      %s67 = sshll.u32 [#allocation8], 4
      %s68 = int_to_ptr.vmem [resolvable:$true] %s67
      %73 = dma.hbm_to_vmem [thread:$0]  %s66, 512, %s68, [#allocation7], 128, 128, 8
    $region37: #{tpu_custom_call.1} parent=1 // pred_fallthru
      _
    // Predicated region
    $region38: #{tpu_custom_call.1} parent=1 // pred_check
      _
    $region39: #{tpu_custom_call.1} parent=1 // pred_check_branch
      %75 = sbr.rel (0) target = $region41
    $region40: #{tpu_custom_call.1} parent=1 // pred_region
      _
    $region41: #{tpu_custom_call.1} parent=1 // pred_fallthru
      _
    // Predicated region
    $region42: #{tpu_custom_call.1} parent=1 // pred_check
      _
    $region43: #{tpu_custom_call.1} parent=1 // pred_check_branch
      %77 = sbr.rel (0) target = $region45
    $region44: #{tpu_custom_call.1} parent=1 // pred_region
      _
    $region45: #{tpu_custom_call.1} parent=1 // pred_fallthru
      _
    // Predicated region
    $region46: #{tpu_custom_call.1} parent=1 // pred_check
      _
    $region47: #{tpu_custom_call.1} parent=1 // pred_check_branch
      %79 = sbr.rel (0) target = $region49
    $region48: #{tpu_custom_call.1} parent=1 // pred_region
      %81 = dma.done [#allocation4], 128
    $region49: #{tpu_custom_call.1} parent=1 // pred_fallthru
      _
    // Predicated region
    $region50: #{tpu_custom_call.1} parent=1 // pred_check
      _
    $region51: #{tpu_custom_call.1} parent=1 // pred_check_branch
      %83 = sbr.rel (0) target = $region53
    $region52: #{tpu_custom_call.1} parent=1 // pred_region
      %85 = dma.done [#allocation7], 512
    $region53: #{tpu_custom_call.1} parent=1 // pred_fallthru
      _
    // Predicated region
    $region54: #{tpu_custom_call.1} parent=1 // pred_check
      _
    $region55: #{tpu_custom_call.1} parent=1 // pred_check_branch
      %87 = sbr.rel (0) target = $region57
    $region56: #{tpu_custom_call.1} parent=1 // pred_region
      %89 = dma.done [#allocation7], 512
    $region57: #{tpu_custom_call.1} parent=1 // pred_fallthru
      _
    %p90 = scmp.eq.s32.totalorder 0, 0
    // Predicated region
    $region58: #{tpu_custom_call.1} parent=1 // pred_check
      %p91 = pneg %p90
    $region59: #{tpu_custom_call.1} parent=1 // pred_check_branch
      %93 = sbr.rel (%p91) target = $region61
    $region60: #{tpu_custom_call.1} parent=1 // pred_region
      %94 = vst [vmem:[#allocation2] sm:$0xff] 0.0
      %95 = vst [vmem:[#allocation2 + $0x8] sm:$0xff] 0.0
      %96 = vst [vmem:[#allocation2 + $0x10] sm:$0xff] 0.0
      %97 = vst [vmem:[#allocation2 + $0x18] sm:$0xff] 0.0
      %v98 = vld [vmem:[%s2] sm:$0xff]
      %v99 = vld [vmem:[#allocation3] sm:$0xff]
      %v100 = vld [vmem:[%s5] sm:$0x1]
      %v101 = vld [vmem:[%s6] sm:$0xff]
      %102 = vset.pattern.permute.xlu0 0
      %103 = vperm.xlu0 %102, %v101
      %v104 = vpop.permute.xlu0 %103
      %v105 = vperm.slane %v100, 0
      %vm106 = vcmp.eq.s32.totalorder %v104, %v105
      %v107 = vsel %vm106, 1, 0
      %v108 = vcvt.s32.f32 %v107
      %v109 = vld [vmem:[%s4] sm:$0xff]
      %v110 = vld [vmem:[%s4 + $0x8] sm:$0xff]
      %v111 = vld [vmem:[%s4 + $0x10] sm:$0xff]
      %v112 = vld [vmem:[%s4 + $0x18] sm:$0xff]
      %v113 = vld [vmem:[%s4 + $0x20] sm:$0xff]
      %v114 = vld [vmem:[%s4 + $0x28] sm:$0xff]
      %v115 = vld [vmem:[%s4 + $0x30] sm:$0xff]
      %v116 = vld [vmem:[%s4 + $0x38] sm:$0xff]
      %v117 = vmul.f32 %v109, %v109
      %v118 = vmul.f32 %v110, %v110
      %v119 = vmul.f32 %v111, %v111
      %v120 = vmul.f32 %v112, %v112
      %v121 = vmul.f32 %v113, %v113
      %v122 = vmul.f32 %v114, %v114
      %v123 = vmul.f32 %v115, %v115
      %v124 = vmul.f32 %v116, %v116
      %vm125 = vcmask 261120
      %v126 = vsel %vm125, %v117, 0.0
      %v127 = vsel %vm125, %v118, 0.0
      %v128 = vadd.f32 %v126, %v127
      %v129 = vsel %vm125, %v119, 0.0
      %v130 = vadd.f32 %v128, %v129
      %v131 = vsel %vm125, %v120, 0.0
      %v132 = vadd.f32 %v130, %v131
      %v133 = vsel %vm125, %v121, 0.0
      %v134 = vadd.f32 %v132, %v133
      %v135 = vsel %vm125, %v122, 0.0
      %v136 = vadd.f32 %v134, %v135
      %v137 = vsel %vm125, %v123, 0.0
      %v138 = vadd.f32 %v136, %v137
      %v139 = vsel %vm125, %v124, 0.0
      %v140 = vadd.f32 %v138, %v139
      %v141 = vrot.slane %v140, 4
      %v142 = vadd.f32 %v140, %v141
      %v143 = vrot.slane %v142, 2
      %v144 = vadd.f32 %v142, %v143
      %v145 = vrot.slane %v144, 1
      %v146 = vadd.f32 %v144, %v145
      %v147 = vadd.f32 %v146, 1e-12
      %v148 = vrsqrt.pop %v147
      %v149 = vmul.f32 %v148, %v147
      %v150 = vmul.f32 %v149, %v148
      %v151 = vmul.f32 0.5, %v150
      %v152 = vsub.f32 1.5, %v151
      %v153 = vmul.f32 %v148, %v152
      %vm154 = vweird.f32 %v147
      %vm155 = vweird.f32 %v148
      %vm156 = vmor %vm154, %vm155
      %v157 = vsel %vm156, %v148, %v153
      %v158 = vmul.f32 %v109, %v157
      %v159 = vmul.f32 %v110, %v157
      %v160 = vmul.f32 %v111, %v157
      %v161 = vmul.f32 %v112, %v157
      %v162 = vmul.f32 %v113, %v157
      %v163 = vmul.f32 %v114, %v157
      %v164 = vmul.f32 %v115, %v157
      %v165 = vmul.f32 %v116, %v157
      %vm166 = vcmask 523264
      %v168 = vsel %vm166, %v98, 0
      %v171 = vsel %vm166, %v99, 0
      %173 = vmatpush.msra.mxu0 0.0
      %174 = vmatpush.msra.mxu0 0.0
      %175 = vmatpush.msra.mxu0 0.0
      %176 = vmatpush.msra.mxu0 0.0
      %177 = vmatpush.msra.mxu0 0.0
      %178 = vmatpush.msra.mxu0 0.0
      %179 = vmatpush.msra.mxu0 0.0
      %180 = vmatpush.msra.mxu0 0.0
      %181 = vmatpush.msra.mxu0 %v165
      %182 = vmatpush.msra.mxu0 %v164
      %183 = vmatpush.msra.mxu0 %v163
      %184 = vmatpush.msra.mxu0 %v162
      %185 = vmatpush.msra.mxu0 %v161
      %186 = vmatpush.msra.mxu0 %v160
      %187 = vmatpush.msra.mxu0 %v159
      %188 = vmatpush.msra.mxu0 %v158
      %189 = vmatmul.f32.gmra.mxu0 %v168
      %v190 = vpop.f32.mrf.mxu0
      %v191 = vadd.f32 0.0, %v190
      %192 = vmatmul.f32.gmra.mxu0 %v171
      %v193 = vpop.f32.mrf.mxu0
      %v194 = vadd.f32 0.0, %v193
      %195 = vdwg.mxu0
      %v196 = vsel %vm125, %v191, -inf
      %197 = vmax.xlane.f32.xlu0 %v196
      %v198 = vpop.xlane.xlu0 %197
      %v199 = vsel %vm125, %v194, -inf
      %200 = vmax.xlane.f32.xlu0 %v199
      %v201 = vpop.xlane.xlu0 %200
      %v202 = vsub.f32 %v191, %v198
      %v203 = vsub.f32 %v194, %v201
      %v204 = vmul.f32 %v202, 1.442695
      %v205 = vpow.pop %v204
      %v206 = vmul.f32 %v203, 1.442695
      %v207 = vpow.pop %v206
      %v208 = vsel %vm125, %v205, 0.0
      %209 = vadd.xlane.f32.xlu0 %v208
      %v210 = vpop.xlane.xlu0 %209
      %v211 = vsel %vm125, %v207, 0.0
      %212 = vadd.xlane.f32.xlu0 %v211
      %v213 = vpop.xlane.xlu0 %212
      %v214 = vlog2.pop %v210
      %v215 = vmul.f32 %v214, 0.6931472
      %v216 = vlog2.pop %v213
      %v217 = vmul.f32 %v216, 0.6931472
      %v218 = vadd.f32 %v198, %v215
      %v219 = vadd.f32 %v201, %v217
      %v220 = vlaneseq
      %v221 = vand.u32 %v220, 127
      %vm222 = vcmp.eq.s32.totalorder %v221, %v104
      %v223 = vsel %vm222, 1, 0
      %v224 = vcvt.s32.f32 %v223
      %v225 = vadd.f32 %v191, %v194
      %v226 = vmul.f32 %v225, %v224
      %v227 = vsel %vm125, %v226, 0.0
      %228 = vadd.xlane.f32.xlu0 %v227
      %v229 = vpop.xlane.xlu0 %228
      %v230 = vrot.slane %v229, 4
      %v231 = vadd.f32 %v229, %v230
      %v232 = vrot.slane %v231, 2
      %v233 = vadd.f32 %v231, %v232
      %v234 = vrot.slane %v233, 1
      %v235 = vadd.f32 %v233, %v234
      %s236 = vtos %v235
      %vm237 = vcmask 7168
      %v238 = vsel %vm237, %v218, 0.0
      %v239 = vsel %vm237, %v219, 0.0
      %v240 = vadd.f32 %v238, %v239
      %241 = vadd.xlane.f32.xlu0 %v240
      %v242 = vpop.xlane.xlu0 %241
      %v243 = vrot.slane %v242, 4
      %v244 = vadd.f32 %v242, %v243
      %v245 = vrot.slane %v244, 2
      %v246 = vadd.f32 %v244, %v245
      %v247 = vrot.slane %v246, 1
      %v248 = vadd.f32 %v246, %v247
      %s249 = vtos %v248
      %s250 = ssub.f32 %s249, %s236
      %v251 = vrcp.pop 8.0
      %v252 = vmul.f32 8.0, %v251
      %v253 = vsub.f32 1.0, %v252
      %v254 = vmul.f32 %v251, %v253
      %v255 = vadd.f32 %v251, %v254
      %vm256 = vweird.f32 %v251
      %v257 = vsel %vm256, %v251, %v255
      %s258 = vtos %v257
      %s259 = smul.f32 %s250, %s258
      %v260 = vstv %s259
      %v261 = vadd.f32 %v260, 0.0
      %vm262 = vcmask 0
      %263 = vst.msk [vmem:[#allocation9] sm:$0x1] %vm262, %v261
      %v264 = vmul.f32 %v98, %v98
      %v265 = vsel %vm166, %v264, 0.0
      %266 = vadd.xlane.f32.xlu0 %v265
      %v267 = vpop.xlane.xlu0 %266
      %v268 = vadd.f32 %v267, 1e-12
      %v269 = vrsqrt.pop %v268
      %v270 = vmul.f32 %v269, %v268
      %v271 = vmul.f32 %v270, %v269
      %v272 = vmul.f32 0.5, %v271
      %v273 = vsub.f32 1.5, %v272
      %v274 = vmul.f32 %v269, %v273
      %vm275 = vweird.f32 %v268
      %vm276 = vweird.f32 %v269
      %vm277 = vmor %vm275, %vm276
      %v278 = vsel %vm277, %v269, %v274
      %v279 = vmul.f32 %v98, %v278
      %v280 = vmul.f32 %v99, %v99
      %v281 = vsel %vm166, %v280, 0.0
      %282 = vadd.xlane.f32.xlu0 %v281
      %v283 = vpop.xlane.xlu0 %282
      %v284 = vadd.f32 %v283, 1e-12
      %v285 = vrsqrt.pop %v284
      %v286 = vmul.f32 %v285, %v284
      %v287 = vmul.f32 %v286, %v285
      %v288 = vmul.f32 0.5, %v287
      %v289 = vsub.f32 1.5, %v288
      %v290 = vmul.f32 %v285, %v289
      %vm291 = vweird.f32 %v284
      %vm292 = vweird.f32 %v285
      %vm293 = vmor %vm291, %vm292
      %v294 = vsel %vm293, %v285, %v290
      %v295 = vmul.f32 %v99, %v294
      %v297 = vsel %vm166, %v279, 0
      %v300 = vsel %vm166, %v295, 0
      %302 = vmatpush.xpose.msra.mxu0 0.0
      %303 = vmatpush.xpose.msra.mxu0 0.0
      %304 = vmatpush.xpose.msra.mxu0 0.0
      %305 = vmatpush.xpose.msra.mxu0 0.0
      %306 = vmatpush.xpose.msra.mxu0 0.0
      %307 = vmatpush.xpose.msra.mxu0 0.0
      %308 = vmatpush.xpose.msra.mxu0 0.0
      %309 = vmatpush.xpose.msra.mxu0 0.0
      %310 = vmatpush.xpose.msra.mxu0 0.0
      %311 = vmatpush.xpose.msra.mxu0 0.0
      %312 = vmatpush.xpose.msra.mxu0 0.0
      %313 = vmatpush.xpose.msra.mxu0 0.0
      %314 = vmatpush.xpose.msra.mxu0 0.0
      %315 = vmatpush.xpose.msra.mxu0 0.0
      %316 = vmatpush.xpose.msra.mxu0 0.0
      %317 = vmatpush.xpose.msra.mxu0 %v300
      %318 = vmatmul.f32.gmra.mxu0 %v297
      %v319 = vpop.f32.mrf.mxu0
      %v320 = vadd.f32 0.0, %v319
      %321 = vdwg.mxu0
      %v322 = vsub.f32 %v320, 0.6
      %v323 = vmul.f32 %v322, -10.0
      %v324 = vmax.f32 %v323, 0.0
      %v325 = vand.u32 2147483647, %v323
      %v326 = vsub.f32 0.0, %v325
      %v327 = vmul.f32 %v326, 1.442695
      %v328 = vpow.pop %v327
      %v329 = vadd.f32 %v328, 1.0
      %v330 = vlog2.pop %v329
      %v331 = vmul.f32 %v330, 0.6931472
      %v332 = vmul.f32 -0.5, %v328
      %v333 = vadd.f32 %v332, 1.0
      %v334 = vmul.f32 %v333, %v328
      %v335 = vand.u32 2147483647, %v328
      %vm336 = vcmp.lt.f32.partialorder %v335, 0.0004427343
      %v337 = vsel %vm336, %v334, %v331
      %v338 = vadd.f32 %v324, %v337
      %v339 = vmul.f32 %v338, %v108
      %v340 = vsub.f32 %v320, 0.4
      %v341 = vmul.f32 %v340, 40.0
      %v342 = vmax.f32 %v341, 0.0
      %v343 = vand.u32 2147483647, %v341
      %v344 = vsub.f32 0.0, %v343
      %v345 = vmul.f32 %v344, 1.442695
      %v346 = vpow.pop %v345
      %v347 = vadd.f32 %v346, 1.0
      %v348 = vlog2.pop %v347
      %v349 = vmul.f32 %v348, 0.6931472
      %v350 = vmul.f32 -0.5, %v346
      %v351 = vadd.f32 %v350, 1.0
      %v352 = vmul.f32 %v351, %v346
      %v353 = vand.u32 2147483647, %v346
      %vm354 = vcmp.lt.f32.partialorder %v353, 0.0004427343
      %v355 = vsel %vm354, %v352, %v349
      %v356 = vadd.f32 %v342, %v355
      %v357 = vsub.f32 1.0, %v108
      %v358 = vmul.f32 %v356, %v357
      %vm359 = vcmask 64512
      %v360 = vsel %vm359, %v339, 0.0
      %361 = vadd.xlane.f32.xlu0 %v360
      %v362 = vpop.xlane.xlu0 %361
      %v363 = vrot.slane %v362, 4
      %v364 = vadd.f32 %v362, %v363
      %v365 = vrot.slane %v364, 2
      %v366 = vadd.f32 %v364, %v365
      %v367 = vrot.slane %v366, 1
      %v368 = vadd.f32 %v366, %v367
      %s369 = vtos %v368
      %v370 = vsel %vm359, %v358, 0.0
      %371 = vadd.xlane.f32.xlu0 %v370
      %v372 = vpop.xlane.xlu0 %371
      %v373 = vrot.slane %v372, 4
      %v374 = vadd.f32 %v372, %v373
      %v375 = vrot.slane %v374, 2
      %v376 = vadd.f32 %v374, %v375
      %v377 = vrot.slane %v376, 1
      %v378 = vadd.f32 %v376, %v377
      %s379 = vtos %v378
      %s380 = sadd.f32 %s369, %s379
      %v381 = vrcp.pop 8.0
      %v382 = vmul.f32 8.0, %v381
      %v383 = vsub.f32 1.0, %v382
      %v384 = vmul.f32 %v381, %v383
      %v385 = vadd.f32 %v381, %v384
      %vm386 = vweird.f32 %v381
      %v387 = vsel %vm386, %v381, %v385
      %s388 = vtos %v387
      %s389 = smul.f32 %s380, %s388
      %v390 = vstv %s389
      %v391 = vadd.f32 %v390, 0.0
      %392 = vst.msk [vmem:[#allocation12] sm:$0x1] %vm262, %v391
      loop: start=0, step=1, limit=4
      $region62: #{tpu_custom_call.1} parent=60 // loop_pre_header
        _
      $region63: #{tpu_custom_call.1} parent=60 // loop_header
        %s394 = sphi 0, %s398
        %p395 = scmp.ge.s32.totalorder %s394, 4
        %v399 = vphi 0.0, %v564
      $region64: #{tpu_custom_call.1} parent=60 // loop_header_branch
        %397 = sbr.rel (%p395) target = $region68
      $region65: #{tpu_custom_call.1} parent=60 // loop_body
        %s400 = smul.u32 %s394, 8
        %s401 = scalar_lea.vmem [#allocation6], %s400
        %v402 = vld [vmem:[%s401] sm:$0xff]
        %v403 = vmul.f32 %v402, %v402
        %v404 = vsel %vm166, %v403, 0.0
        %405 = vadd.xlane.f32.xlu0 %v404
        %v406 = vpop.xlane.xlu0 %405
        %v407 = vadd.f32 %v406, 1e-12
        %v408 = vrsqrt.pop %v407
        %v409 = vmul.f32 %v408, %v407
        %v410 = vmul.f32 %v409, %v408
        %v411 = vmul.f32 0.5, %v410
        %v412 = vsub.f32 1.5, %v411
        %v413 = vmul.f32 %v408, %v412
        %vm414 = vweird.f32 %v407
        %vm415 = vweird.f32 %v408
        %vm416 = vmor %vm414, %vm415
        %v417 = vsel %vm416, %v408, %v413
        %v418 = vmul.f32 %v402, %v417
        %s419 = scalar_lea.vmem [#allocation8], %s400
        %v420 = vld [vmem:[%s419] sm:$0xff]
        %v421 = vmul.f32 %v420, %v420
        %v422 = vsel %vm166, %v421, 0.0
        %423 = vadd.xlane.f32.xlu0 %v422
        %v424 = vpop.xlane.xlu0 %423
        %v425 = vadd.f32 %v424, 1e-12
        %v426 = vrsqrt.pop %v425
        %v427 = vmul.f32 %v426, %v425
        %v428 = vmul.f32 %v427, %v426
        %v429 = vmul.f32 0.5, %v428
        %v430 = vsub.f32 1.5, %v429
        %v431 = vmul.f32 %v426, %v430
        %vm432 = vweird.f32 %v425
        %vm433 = vweird.f32 %v426
        %vm434 = vmor %vm432, %vm433
        %v435 = vsel %vm434, %v426, %v431
        %v436 = vmul.f32 %v420, %v435
        %v438 = vsel %vm166, %v418, 0
        %v441 = vsel %vm166, %v436, 0
        %443 = vmatpush.xpose.msra.mxu0 0.0
        %444 = vmatpush.xpose.msra.mxu0 0.0
        %445 = vmatpush.xpose.msra.mxu0 0.0
        %446 = vmatpush.xpose.msra.mxu0 0.0
        %447 = vmatpush.xpose.msra.mxu0 0.0
        %448 = vmatpush.xpose.msra.mxu0 0.0
        %449 = vmatpush.xpose.msra.mxu0 0.0
        %450 = vmatpush.xpose.msra.mxu0 0.0
        %451 = vmatpush.xpose.msra.mxu0 0.0
        %452 = vmatpush.xpose.msra.mxu0 0.0
        %453 = vmatpush.xpose.msra.mxu0 0.0
        %454 = vmatpush.xpose.msra.mxu0 0.0
        %455 = vmatpush.xpose.msra.mxu0 0.0
        %456 = vmatpush.xpose.msra.mxu0 0.0
        %457 = vmatpush.xpose.msra.mxu0 0.0
        %458 = vmatpush.xpose.msra.mxu0 %v441
        %459 = vmatmul.f32.gmra.mxu0 %v438
        %v460 = vpop.f32.mrf.mxu0
        %v461 = vadd.f32 0.0, %v460
        %462 = vdwg.mxu0
        %s463 = scalar_lea.vmem %s9, %s400
        %v464 = vld [vmem:[%s463] sm:$0xff]
        %s465 = scalar_lea.vmem %s10, %s394
        %v466 = vld [vmem:[%s465] sm:$0x1]
        %468 = vset.pattern.permute.xlu0 0
        %469 = vperm.xlu0 %468, %v464
        %v470 = vpop.permute.xlu0 %469
        %v473 = vperm.slane %v466, 0
        %v475 = vmul.f32 %v470, %v473
        %v476 = vsub.f32 %v461, 0.6
        %v477 = vmul.f32 %v476, -10.0
        %v478 = vmax.f32 %v477, 0.0
        %v479 = vand.u32 2147483647, %v477
        %v480 = vsub.f32 0.0, %v479
        %v481 = vmul.f32 %v480, 1.442695
        %v482 = vpow.pop %v481
        %v483 = vadd.f32 %v482, 1.0
        %v484 = vlog2.pop %v483
        %v485 = vmul.f32 %v484, 0.6931472
        %v486 = vmul.f32 -0.5, %v482
        %v487 = vadd.f32 %v486, 1.0
        %v488 = vmul.f32 %v487, %v482
        %v489 = vand.u32 2147483647, %v482
        %vm490 = vcmp.lt.f32.partialorder %v489, 0.0004427343
        %v491 = vsel %vm490, %v488, %v485
        %v492 = vadd.f32 %v478, %v491
        %v493 = vmul.f32 %v108, %v475
        %v494 = vmul.f32 %v492, %v493
        %v495 = vsub.f32 %v461, 0.4
        %v496 = vmul.f32 %v495, 40.0
        %v497 = vmax.f32 %v496, 0.0
        %v498 = vand.u32 2147483647, %v496
        %v499 = vsub.f32 0.0, %v498
        %v500 = vmul.f32 %v499, 1.442695
        %v501 = vpow.pop %v500
        %v502 = vadd.f32 %v501, 1.0
        %v503 = vlog2.pop %v502
        %v504 = vmul.f32 %v503, 0.6931472
        %v505 = vmul.f32 -0.5, %v501
        %v506 = vadd.f32 %v505, 1.0
        %v507 = vmul.f32 %v506, %v501
        %v508 = vand.u32 2147483647, %v501
        %vm509 = vcmp.lt.f32.partialorder %v508, 0.0004427343
        %v510 = vsel %vm509, %v507, %v504
        %v511 = vadd.f32 %v497, %v510
        %v512 = vmul.f32 %v357, %v475
        %v513 = vmul.f32 %v511, %v512
        %v514 = vsel %vm359, %v494, 0.0
        %515 = vadd.xlane.f32.xlu0 %v514
        %v516 = vpop.xlane.xlu0 %515
        %v517 = vrot.slane %v516, 4
        %v518 = vadd.f32 %v516, %v517
        %v519 = vrot.slane %v518, 2
        %v520 = vadd.f32 %v518, %v519
        %v521 = vrot.slane %v520, 1
        %v522 = vadd.f32 %v520, %v521
        %s523 = vtos %v522
        %v524 = vsel %vm359, %v513, 0.0
        %525 = vadd.xlane.f32.xlu0 %v524
        %v526 = vpop.xlane.xlu0 %525
        %v527 = vrot.slane %v526, 4
        %v528 = vadd.f32 %v526, %v527
        %v529 = vrot.slane %v528, 2
        %v530 = vadd.f32 %v528, %v529
        %v531 = vrot.slane %v530, 1
        %v532 = vadd.f32 %v530, %v531
        %s533 = vtos %v532
        %s534 = sadd.f32 %s523, %s533
        %v535 = vsel %vm359, %v475, 0.0
        %536 = vadd.xlane.f32.xlu0 %v535
        %v537 = vpop.xlane.xlu0 %536
        %v538 = vrot.slane %v537, 4
        %v539 = vadd.f32 %v537, %v538
        %v540 = vrot.slane %v539, 2
        %v541 = vadd.f32 %v539, %v540
        %v542 = vrot.slane %v541, 1
        %v543 = vadd.f32 %v541, %v542
        %s544 = vtos %v543
        %s545 = sadd.f32 %s544, 1e-06
        %v546 = vstv %s545
        %v547 = vrcp.pop %v546
        %v548 = vmul.f32 %v546, %v547
        %v549 = vsub.f32 1.0, %v548
        %v550 = vmul.f32 %v547, %v549
        %v551 = vadd.f32 %v547, %v550
        %vm552 = vweird.f32 %v546
        %vm553 = vweird.f32 %v547
        %vm554 = vmor %vm552, %vm553
        %v555 = vsel %vm554, %v547, %v551
        %v556 = vand.u32 2147483647, %v546
        %vm557 = vcmp.eq.f32.partialorder %v556, 8.507059e+37
        %v558 = vand.u32 %v546, 2147483648
        %v559 = vor.u32 1.1754944e-38, %v558
        %v560 = vsel %vm557, %v559, %v555
        %s561 = vtos %v560
        %s562 = smul.f32 %s534, %s561
        %v563 = vstv %s562
        %v564 = vadd.f32 %v399, %v563
      $region66: #{tpu_custom_call.1} parent=60 // loop_footer
        %s398 = sadd.s32 1, %s394
      $region67: #{tpu_custom_call.1} parent=60 // loop_footer_branch
        %393 = sbr.rel target = $region63
      $region68: #{tpu_custom_call.1} parent=60 // loop_exit
        _
      %v565 = vmul.f32 %v399, 0.25
      %566 = vst.msk [vmem:[#allocation13] sm:$0x1] %vm262, %v565
    $region61: #{tpu_custom_call.1} parent=1 // pred_fallthru
      _
    %v567 = vld [vmem:[%s0] sm:$0xff]
    %v568 = vld [vmem:[%s0 + $0x8] sm:$0xff]
    %v569 = vld [vmem:[%s0 + $0x10] sm:$0xff]
    %v570 = vld [vmem:[%s0 + $0x18] sm:$0xff]
    %v571 = vld [vmem:[%s0 + $0x20] sm:$0xff]
    %v572 = vld [vmem:[%s0 + $0x28] sm:$0xff]
    %v573 = vld [vmem:[%s0 + $0x30] sm:$0xff]
    %v574 = vld [vmem:[%s0 + $0x38] sm:$0xff]
    %v575 = vld [vmem:[%s1] sm:$0xff]
    %v576 = vld [vmem:[%s1 + $0x8] sm:$0xff]
    %v577 = vld [vmem:[%s1 + $0x10] sm:$0xff]
    %v578 = vld [vmem:[%s1 + $0x18] sm:$0xff]
    %v579 = vunpack.c.l.bf16 %v575
    %v580 = vunpack.c.h.bf16 %v575
    %v581 = vunpack.c.l.bf16 %v576
    %v582 = vunpack.c.h.bf16 %v576
    %v583 = vunpack.c.l.bf16 %v577
    %v584 = vunpack.c.h.bf16 %v577
    %v585 = vunpack.c.l.bf16 %v578
    %v586 = vunpack.c.h.bf16 %v578
    %v587 = vmax.f32 %v567, 0.0
    %v588 = vmax.f32 %v568, 0.0
    %v589 = vmax.f32 %v569, 0.0
    %v590 = vmax.f32 %v570, 0.0
    %v591 = vmax.f32 %v571, 0.0
    %v592 = vmax.f32 %v572, 0.0
    %v593 = vmax.f32 %v573, 0.0
    %v594 = vmax.f32 %v574, 0.0
    %v595 = vmul.f32 %v567, %v579
    %v596 = vmul.f32 %v568, %v580
    %v597 = vmul.f32 %v569, %v581
    %v598 = vmul.f32 %v570, %v582
    %v599 = vmul.f32 %v571, %v583
    %v600 = vmul.f32 %v572, %v584
    %v601 = vmul.f32 %v573, %v585
    %v602 = vmul.f32 %v574, %v586
    %v603 = vsub.f32 %v587, %v595
    %v604 = vsub.f32 %v588, %v596
    %v605 = vsub.f32 %v589, %v597
    %v606 = vsub.f32 %v590, %v598
    %v607 = vsub.f32 %v591, %v599
    %v608 = vsub.f32 %v592, %v600
    %v609 = vsub.f32 %v593, %v601
    %v610 = vsub.f32 %v594, %v602
    %v611 = vand.u32 2147483647, %v567
    %v612 = vand.u32 2147483647, %v568
    %v613 = vand.u32 2147483647, %v569
    %v614 = vand.u32 2147483647, %v570
    %v615 = vand.u32 2147483647, %v571
    %v616 = vand.u32 2147483647, %v572
    %v617 = vand.u32 2147483647, %v573
    %v618 = vand.u32 2147483647, %v574
    %v619 = vsub.f32 0.0, %v611
    %v620 = vsub.f32 0.0, %v612
    %v621 = vsub.f32 0.0, %v613
    %v622 = vsub.f32 0.0, %v614
    %v623 = vsub.f32 0.0, %v615
    %v624 = vsub.f32 0.0, %v616
    %v625 = vsub.f32 0.0, %v617
    %v626 = vsub.f32 0.0, %v618
    %v627 = vmul.f32 %v619, 1.442695
    %v628 = vpow.pop %v627
    %v629 = vmul.f32 %v620, 1.442695
    %v630 = vpow.pop %v629
    %v631 = vmul.f32 %v621, 1.442695
    %v632 = vpow.pop %v631
    %v633 = vmul.f32 %v622, 1.442695
    %v634 = vpow.pop %v633
    %v635 = vmul.f32 %v623, 1.442695
    %v636 = vpow.pop %v635
    %v637 = vmul.f32 %v624, 1.442695
    %v638 = vpow.pop %v637
    %v639 = vmul.f32 %v625, 1.442695
    %v640 = vpow.pop %v639
    %v641 = vmul.f32 %v626, 1.442695
    %v642 = vpow.pop %v641
    %v643 = vadd.f32 %v628, 1.0
    %v644 = vlog2.pop %v643
    %v645 = vmul.f32 %v644, 0.6931472
    %v646 = vmul.f32 -0.5, %v628
    %v647 = vadd.f32 %v646, 1.0
    %v648 = vmul.f32 %v647, %v628
    %v649 = vand.u32 2147483647, %v628
    %vm650 = vcmp.lt.f32.partialorder %v649, 0.0004427343
    %v651 = vsel %vm650, %v648, %v645
    %v652 = vadd.f32 %v630, 1.0
    %v653 = vlog2.pop %v652
    %v654 = vmul.f32 %v653, 0.6931472
    %v655 = vmul.f32 -0.5, %v630
    %v656 = vadd.f32 %v655, 1.0
    %v657 = vmul.f32 %v656, %v630
    %v658 = vand.u32 2147483647, %v630
    %vm659 = vcmp.lt.f32.partialorder %v658, 0.0004427343
    %v660 = vsel %vm659, %v657, %v654
    %v661 = vadd.f32 %v632, 1.0
    %v662 = vlog2.pop %v661
    %v663 = vmul.f32 %v662, 0.6931472
    %v664 = vmul.f32 -0.5, %v632
    %v665 = vadd.f32 %v664, 1.0
    %v666 = vmul.f32 %v665, %v632
    %v667 = vand.u32 2147483647, %v632
    %vm668 = vcmp.lt.f32.partialorder %v667, 0.0004427343
    %v669 = vsel %vm668, %v666, %v663
    %v670 = vadd.f32 %v634, 1.0
    %v671 = vlog2.pop %v670
    %v672 = vmul.f32 %v671, 0.6931472
    %v673 = vmul.f32 -0.5, %v634
    %v674 = vadd.f32 %v673, 1.0
    %v675 = vmul.f32 %v674, %v634
    %v676 = vand.u32 2147483647, %v634
    %vm677 = vcmp.lt.f32.partialorder %v676, 0.0004427343
    %v678 = vsel %vm677, %v675, %v672
    %v679 = vadd.f32 %v636, 1.0
    %v680 = vlog2.pop %v679
    %v681 = vmul.f32 %v680, 0.6931472
    %v682 = vmul.f32 -0.5, %v636
    %v683 = vadd.f32 %v682, 1.0
    %v684 = vmul.f32 %v683, %v636
    %v685 = vand.u32 2147483647, %v636
    %vm686 = vcmp.lt.f32.partialorder %v685, 0.0004427343
    %v687 = vsel %vm686, %v684, %v681
    %v688 = vadd.f32 %v638, 1.0
    %v689 = vlog2.pop %v688
    %v690 = vmul.f32 %v689, 0.6931472
    %v691 = vmul.f32 -0.5, %v638
    %v692 = vadd.f32 %v691, 1.0
    %v693 = vmul.f32 %v692, %v638
    %v694 = vand.u32 2147483647, %v638
    %vm695 = vcmp.lt.f32.partialorder %v694, 0.0004427343
    %v696 = vsel %vm695, %v693, %v690
    %v697 = vadd.f32 %v640, 1.0
    %v698 = vlog2.pop %v697
    %v699 = vmul.f32 %v698, 0.6931472
    %v700 = vmul.f32 -0.5, %v640
    %v701 = vadd.f32 %v700, 1.0
    %v702 = vmul.f32 %v701, %v640
    %v703 = vand.u32 2147483647, %v640
    %vm704 = vcmp.lt.f32.partialorder %v703, 0.0004427343
    %v705 = vsel %vm704, %v702, %v699
    %v706 = vadd.f32 %v642, 1.0
    %v707 = vlog2.pop %v706
    %v708 = vmul.f32 %v707, 0.6931472
    %v709 = vmul.f32 -0.5, %v642
    %v710 = vadd.f32 %v709, 1.0
    %v711 = vmul.f32 %v710, %v642
    %v712 = vand.u32 2147483647, %v642
    %vm713 = vcmp.lt.f32.partialorder %v712, 0.0004427343
    %v714 = vsel %vm713, %v711, %v708
    %v715 = vadd.f32 %v603, %v651
    %v716 = vadd.f32 %v604, %v660
    %v717 = vadd.f32 %v605, %v669
    %v718 = vadd.f32 %v606, %v678
    %v719 = vadd.f32 %v607, %v687
    %v720 = vadd.f32 %v608, %v696
    %v721 = vadd.f32 %v609, %v705
    %v722 = vadd.f32 %v610, %v714
    %v723 = vld [vmem:[#allocation2] sm:$0xff]
    %v724 = vld [vmem:[#allocation2 + $0x8] sm:$0xff]
    %v725 = vld [vmem:[#allocation2 + $0x10] sm:$0xff]
    %v726 = vld [vmem:[#allocation2 + $0x18] sm:$0xff]
    %v727 = vadd.f32 %v715, %v719
    %v728 = vadd.f32 %v716, %v720
    %v729 = vadd.f32 %v717, %v721
    %v730 = vadd.f32 %v718, %v722
    %v731 = vadd.f32 %v723, %v727
    %v732 = vadd.f32 %v724, %v728
    %v733 = vadd.f32 %v725, %v729
    %v734 = vadd.f32 %v726, %v730
    %735 = vst [vmem:[#allocation2] sm:$0xff] %v731
    %736 = vst [vmem:[#allocation2 + $0x8] sm:$0xff] %v732
    %737 = vst [vmem:[#allocation2 + $0x10] sm:$0xff] %v733
    %738 = vst [vmem:[#allocation2 + $0x18] sm:$0xff] %v734
    // Predicated region
    $region69: #{tpu_custom_call.1} parent=1 // pred_check
      %p739 = pneg %p90
    $region70: #{tpu_custom_call.1} parent=1 // pred_check_branch
      %741 = sbr.rel (%p739) target = $region72
    $region71: #{tpu_custom_call.1} parent=1 // pred_region
      %v742 = vld [vmem:[#allocation2] sm:$0xff]
      %v743 = vld [vmem:[#allocation2 + $0x8] sm:$0xff]
      %v744 = vld [vmem:[#allocation2 + $0x10] sm:$0xff]
      %v745 = vld [vmem:[#allocation2 + $0x18] sm:$0xff]
      %v746 = vadd.f32 %v742, %v743
      %v747 = vadd.f32 %v746, %v744
      %v748 = vadd.f32 %v747, %v745
      %749 = vadd.xlane.f32.xlu0 %v748
      %v750 = vpop.xlane.xlu0 %749
      %v751 = vrot.slane %v750, 4
      %v752 = vadd.f32 %v750, %v751
      %v753 = vrot.slane %v752, 2
      %v754 = vadd.f32 %v752, %v753
      %v755 = vrot.slane %v754, 1
      %v756 = vadd.f32 %v754, %v755
      %s757 = vtos %v756
      %v758 = vstv %s757
      %v759 = vmul.f32 %v758, 0.00012207031
      %vm760 = vcmask 0
      %761 = vst.msk [vmem:[#allocation10] sm:$0x1] %vm760, %v759
    $region72: #{tpu_custom_call.1} parent=1 // pred_fallthru
      _
    // Predicated region
    $region73: #{tpu_custom_call.1} parent=1 // pred_check
      _
    $region74: #{tpu_custom_call.1} parent=1 // pred_check_branch
      %763 = sbr.rel (0) target = $region76
    $region75: #{tpu_custom_call.1} parent=1 // pred_region
      %765 = vsyncadd [#allocation5], 0
      %s767 = sshll.u32 [#allocation9], 4
      %s768 = int_to_ptr.vmem [resolvable:$true] %s767
      %s769 = sshll.u32 %s11, 4
      %s770 = int_to_ptr.hbm [resolvable:$true] %s769
      %772 = dma.vmem_to_hbm [thread:$0]  %s768, 16, %s770, [#allocation5]
    $region76: #{tpu_custom_call.1} parent=1 // pred_fallthru
      _
    // Predicated region
    $region77: #{tpu_custom_call.1} parent=1 // pred_check
      _
    $region78: #{tpu_custom_call.1} parent=1 // pred_check_branch
      %774 = sbr.rel (0) target = $region80
    $region79: #{tpu_custom_call.1} parent=1 // pred_region
      %776 = vsyncadd [#allocation11], 0
      %s778 = sshll.u32 [#allocation10], 4
      %s779 = int_to_ptr.vmem [resolvable:$true] %s778
      %s780 = sshll.u32 %s12, 4
      %s781 = int_to_ptr.hbm [resolvable:$true] %s780
      %783 = dma.vmem_to_hbm [thread:$0]  %s779, 16, %s781, [#allocation11]
    $region80: #{tpu_custom_call.1} parent=1 // pred_fallthru
      _
    // Predicated region
    $region81: #{tpu_custom_call.1} parent=1 // pred_check
      _
    $region82: #{tpu_custom_call.1} parent=1 // pred_check_branch
      %785 = sbr.rel (0) target = $region84
    $region83: #{tpu_custom_call.1} parent=1 // pred_region
      %787 = vsyncadd [#allocation11], 0
      %s789 = sshll.u32 [#allocation12], 4
      %s790 = int_to_ptr.vmem [resolvable:$true] %s789
      %s791 = sshll.u32 %s13, 4
      %s792 = int_to_ptr.hbm [resolvable:$true] %s791
      %794 = dma.vmem_to_hbm [thread:$0]  %s790, 16, %s792, [#allocation11]
    $region84: #{tpu_custom_call.1} parent=1 // pred_fallthru
      _
    // Predicated region
    $region85: #{tpu_custom_call.1} parent=1 // pred_check
      _
    $region86: #{tpu_custom_call.1} parent=1 // pred_check_branch
      %796 = sbr.rel (0) target = $region88
    $region87: #{tpu_custom_call.1} parent=1 // pred_region
      %798 = vsyncadd [#allocation14], 0
      %s800 = sshll.u32 [#allocation13], 4
      %s801 = int_to_ptr.vmem [resolvable:$true] %s800
      %s802 = sshll.u32 %s14, 4
      %s803 = int_to_ptr.hbm [resolvable:$true] %s802
      %805 = dma.vmem_to_hbm [thread:$0]  %s801, 16, %s803, [#allocation14]
    $region88: #{tpu_custom_call.1} parent=1 // pred_fallthru
      _
    // Predicated region
    $region89: #{tpu_custom_call.1} parent=1 // pred_check
      _
    $region90: #{tpu_custom_call.1} parent=1 // pred_check_branch
      %807 = sbr.rel (0) target = $region92
    $region91: #{tpu_custom_call.1} parent=1 // pred_region
      %809 = dma.done [#allocation5], 16
    $region92: #{tpu_custom_call.1} parent=1 // pred_fallthru
      _
    // Predicated region
    $region93: #{tpu_custom_call.1} parent=1 // pred_check
      _
    $region94: #{tpu_custom_call.1} parent=1 // pred_check_branch
      %811 = sbr.rel (0) target = $region96
    $region95: #{tpu_custom_call.1} parent=1 // pred_region
      %813 = dma.done [#allocation11], 16
    $region96: #{tpu_custom_call.1} parent=1 // pred_fallthru
      _
    // Predicated region
    $region97: #{tpu_custom_call.1} parent=1 // pred_check
      _
    $region98: #{tpu_custom_call.1} parent=1 // pred_check_branch
      %815 = sbr.rel (0) target = $region100
    $region99: #{tpu_custom_call.1} parent=1 // pred_region
      %817 = dma.done [#allocation11], 16
    $region100: #{tpu_custom_call.1} parent=1 // pred_fallthru
      _
    // Predicated region
    $region101: #{tpu_custom_call.1} parent=1 // pred_check
      _
    $region102: #{tpu_custom_call.1} parent=1 // pred_check_branch
      %819 = sbr.rel (0) target = $region104
    $region103: #{tpu_custom_call.1} parent=1 // pred_region
      %821 = dma.done [#allocation14], 16
    $region104: #{tpu_custom_call.1} parent=1 // pred_fallthru
      _
    %822 = vsyncpa [#allocation4], 1
    %823 = vsyncpa [#allocation7], 1
    %824 = vsyncpa [#allocation5], 1
    %825 = vsyncpa [#allocation11], 1
    %826 = vsyncpa [#allocation14], 1

</llo_original>
